<compile_context>
chip_gen: v6e
topology: v6e:2x2x1
jax: 0.10.0
libtpu: 0.0.40
codegen_flags: <defaults>
</compile_context>

<pallas_src>
import jax
import jax.numpy as jnp
from jax.experimental import pallas as pl
from jax.experimental.pallas import tpu as pltpu


def _round_up(a, b):
    return -(-a // b) * b


def _padded_bytes(shape, itemsize, sublane_mult):
    """VMEM footprint of a block: last dim padded to 128 lanes, 2nd-to-last to sublanes."""
    s = list(shape)
    if len(s) >= 1:
        s[-1] = _round_up(s[-1], 128)
    if len(s) >= 2:
        s[-2] = _round_up(s[-2], sublane_mult)
    n = 1
    for d in s:
        n *= int(d)
    return n * itemsize


def _vmem_capacity_bytes():
    try:
        return int(pltpu.get_tpu_info().vmem_capacity_bytes)
    except Exception:
        return 64 << 20  # conservative (v7x per-TC VMEM)


def _mxu_is_256_wide():
    try:
        kind = jax.devices()[0].device_kind.lower()
    except Exception:
        return False
    # v2-v5 MXUs are 128 wide; v6e/v7x are 256 wide.
    return not any(tag in kind for tag in ("v2", "v3", "v4", "v5"))


def _make_conv_kernel(kh, kw_cin, stride, tile_oh, ow_pad):
    m = tile_oh * ow_pad

    def kernel(x_ref, w_ref, b_ref, o_ref, acc_ref):
        # x_ref:   (tile_ih, ow_pad, KW*Cin)   kw-folded padded input row slab
        # w_ref:   (KH, KW*Cin, tile_n)        per-tap-row weights, lane-padded Cout
        # b_ref:   (1, tile_n)                 lane-padded bias (f32)
        # o_ref:   (tile_oh*ow_pad, tile_n)    lane-dense output tile
        # acc_ref: (tile_oh*ow_pad, tile_n)    f32 VMEM accumulator (scratch)
        for i in range(kh):                    # static unroll over the KH tap rows
            if stride == 1:
                xs = x_ref[pl.ds(i, tile_oh), :, :]
            else:
                # TODO(synk): stride > 1 uses a strided leading-dim slice; pre-decimating
                # rows host-side (like the kw fold) would keep every slice unit-stride.
                xs = x_ref[pl.ds(i, tile_oh, stride=stride), :, :]
            part = jnp.dot(xs.reshape(m, kw_cin), w_ref[i],
                           preferred_element_type=jnp.float32)
            if i == 0:
                acc_ref[...] = part + b_ref[...]     # bias folded into first tap
            else:
                acc_ref[...] += part
        o_ref[...] = acc_ref[...].astype(o_ref.dtype)

    return kernel


def lrp_conv2d_forward(x_nchw, weight_oihw, bias, stride=1, padding=0,
                       tile_rows=1024, compute_dtype=None):
    """Forward of LRPConv2d: y = conv2d(x, W, b, stride, padding), NCHW in/out.

    compute_dtype=jnp.bfloat16 enables a bf16 MXU path on v6e/v7x (accumulation
    stays f32); default keeps the input dtype.
    """
    cout, cin, kh, kw = weight_oihw.shape
    n, _, h, w = x_nchw.shape
    oh = (h + 2 * padding - kh) // stride + 1
    ow = (w + 2 * padding - kw) // stride + 1
    out_dtype = x_nchw.dtype
    cdtype = jnp.dtype(compute_dtype) if compute_dtype is not None else jnp.dtype(x_nchw.dtype)
    itemsize = cdtype.itemsize
    sub_mult = {4: 8, 2: 16, 1: 32}.get(itemsize, 8)
    kw_cin = kw * cin

    # ---- Cout tiling: lane-dense output, 256-wide tile on v6e/v7x MXUs -----
    tile_n = 256 if (_mxu_is_256_wide() and cout > 128) else 128
    cout_pad = _round_up(cout, tile_n)
    num_cn = cout_pad // tile_n

    # ---- output-row tiling (VMEM-budget aware, lane/sublane-padded sizes) --
    ow_pad = _round_up(ow, sub_mult)     # keeps the in-kernel reshape relayout-free
    vmem_cap = _vmem_capacity_bytes()
    out_isz = jnp.dtype(out_dtype).itemsize

    def est_vmem(t_oh):
        t_ih = (t_oh - 1) * stride + kh
        mt = t_oh * ow_pad
        return (2 * _padded_bytes((t_ih, ow_pad, kw_cin), itemsize, sub_mult)     # x slab
                + 2 * _padded_bytes((kh, kw_cin, tile_n), itemsize, sub_mult)     # weights
                + 2 * _padded_bytes((1, tile_n), 4, 8)                            # bias
                + 2 * _padded_bytes((mt, tile_n), out_isz, sub_mult)              # output
                + _padded_bytes((mt, tile_n), 4, 8))                              # f32 acc

    budget = int(0.55 * vmem_cap)
    tile_oh = max(1, min(oh, max(1, tile_rows // ow_pad)))
    if tile_oh < oh and est_vmem(oh) <= budget:
        tile_oh = oh                      # whole image per slab -> no host-side slab stacking
    while tile_oh > 1 and est_vmem(tile_oh) > budget:
        tile_oh = (tile_oh + 1) // 2
    num_t = -(-oh // tile_oh)             # cdiv
    oh_pad = num_t * tile_oh
    tile_ih = (tile_oh - 1) * stride + kh
    m_tile = tile_oh * ow_pad

    # ---- glue: NCHW -> padded NHWC, fold the KW taps into the channel dim --
    x_nhwc = jnp.transpose(x_nchw, (0, 2, 3, 1)).astype(cdtype)
    hp_needed = (oh_pad - 1) * stride + kh
    wp_needed = (ow_pad - 1) * stride + kw
    pad_h_hi = padding + max(0, hp_needed - (h + 2 * padding))
    pad_w_hi = padding + max(0, wp_needed - (w + 2 * padding))
    x_pad = jnp.pad(x_nhwc, ((0, 0), (padding, pad_h_hi), (padding, pad_w_hi), (0, 0)))
    # x_kw[n, y, c, j*cin + q] = x_pad[n, y, c*stride + j, q]  (width im2col, stride folded)
    x_kw = jnp.concatenate(
        [x_pad[:, :, j: j + (ow_pad - 1) * stride + 1: stride, :] for j in range(kw)],
        axis=-1)                           # (N, Hp, ow_pad, KW*Cin) -- lane-denser input

    if num_t == 1:
        x_arg = x_kw[:, :tile_ih]          # (N, tile_ih, ow_pad, KW*Cin), no extra HBM copy
        x_spec = pl.BlockSpec((None, tile_ih, ow_pad, kw_cin),
                              lambda b, t, c: (b, t, 0, 0))
    else:
        # TODO(synk): replace with memory_space=pl.ANY + manual halo DMA so the
        # overlapping row slabs need not be materialized again in HBM.
        x_arg = jnp.stack(
            [x_kw[:, t * tile_oh * stride: t * tile_oh * stride + tile_ih]
             for t in range(num_t)], axis=1)   # (N, num_t, tile_ih, ow_pad, KW*Cin)
        x_spec = pl.BlockSpec((None, None, tile_ih, ow_pad, kw_cin),
                              lambda b, t, c: (b, t, 0, 0, 0))

    # weights: (Cout, Cin, KH, KW) -> (KH, KW*Cin, Cout_pad); bias -> (1, Cout_pad) f32.
    w_rows = jnp.transpose(weight_oihw, (2, 3, 1, 0)).reshape(kh, kw_cin, cout)
    w_rows = jnp.pad(w_rows, ((0, 0), (0, 0), (0, cout_pad - cout))).astype(cdtype)
    b_mat = jnp.pad(bias.reshape(1, cout).astype(jnp.float32),
                    ((0, 0), (0, cout_pad - cout)))

    kernel = _make_conv_kernel(kh, kw_cin, stride, tile_oh, ow_pad)

    vmem_est = est_vmem(tile_oh)
    vmem_limit = int(min(0.7 * vmem_cap, max(16 << 20, 2 * vmem_est)))
    cost = pl.CostEstimate(
        flops=2 * n * oh * ow * kh * kw * cin * cout,
        transcendentals=0,
        bytes_accessed=int(x_arg.size * itemsize + w_rows.size * itemsize
                           + b_mat.size * 4
                           + n * oh_pad * ow_pad * cout_pad * out_isz))

    out = pl.pallas_call(
        kernel,
        out_shape=jax.ShapeDtypeStruct((n, oh_pad * ow_pad, cout_pad), out_dtype),
        grid_spec=pltpu.PrefetchScalarGridSpec(
            num_scalar_prefetch=0,
            grid=(n, num_t, num_cn),        # Cout-tile axis innermost -> x slab revisited
            in_specs=[
                x_spec,
                pl.BlockSpec((kh, kw_cin, tile_n), lambda b, t, c: (0, 0, c)),
                pl.BlockSpec((1, tile_n), lambda b, t, c: (0, c)),
            ],
            out_specs=pl.BlockSpec((None, m_tile, tile_n), lambda b, t, c: (b, t, c)),
            scratch_shapes=[pltpu.VMEM((m_tile, tile_n), jnp.float32)],
        ),
        compiler_params=pltpu.CompilerParams(
            dimension_semantics=("parallel", "parallel", "arbitrary"),
            vmem_limit_bytes=vmem_limit),
        cost_estimate=cost,
    )(x_arg, w_rows, b_mat)

    out = out.reshape(n, oh_pad, ow_pad, cout_pad)[:, :oh, :ow, :cout]
    return jnp.transpose(out, (0, 3, 1, 2))   # back to NCHW


def _reference_conv(x_nchw, weight_oihw, bias, stride, padding):
    y = jax.lax.conv_general_dilated(
        x_nchw, weight_oihw,
        window_strides=(stride, stride),
        padding=[(padding, padding), (padding, padding)],
        dimension_numbers=("NCHW", "OIHW", "NCHW"),
    )
    return y + bias.reshape(1, -1, 1, 1)


if __name__ == "__main__":
    # Module config: LRPConv2d(in_channels=4, out_channels=8, kernel_size=3,
    #                          stride=1, padding=1)
    N, CIN, H, W = 2, 4, 16, 16
    COUT, KH, KW = 8, 3, 3
    STRIDE, PADDING = 1, 1

    key = jax.random.PRNGKey(0)
    kx, kw_, kb = jax.random.split(key, 3)

    x = jax.random.normal(kx, (N, CIN, H, W), dtype=jnp.float32)

    # Deterministic param init mirroring nn.Conv2d's default (uniform +/- 1/sqrt(fan_in)).
    fan_in = CIN * KH * KW
    bound = 1.0 / jnp.sqrt(jnp.float32(fan_in))
    weight = jax.random.uniform(kw_, (COUT, CIN, KH, KW), dtype=jnp.float32,
                                minval=-bound, maxval=bound)
    bias = jax.random.uniform(kb, (COUT,), dtype=jnp.float32,
                              minval=-bound, maxval=bound)

    # TODO(synk): relprop() (LRP relevance backward pass) is not part of forward();
    # only the forward conv is implemented here.

    y = lrp_conv2d_forward(x, weight, bias, stride=STRIDE, padding=PADDING)
    y = jax.block_until_ready(y)

    y_ref = _reference_conv(x, weight, bias, STRIDE, PADDING)
    assert y.shape == (N, COUT, H, W)
    assert jnp.allclose(y, y_ref, atol=1e-4, rtol=1e-4), "mismatch vs reference conv"

    print("KERNEL_OK")
</pallas_src>

<mosaic_0001>
module attributes {stable_mosaic.version = 11 : i64} {
  func.func @kernel(%arg0: i32, %arg1: i32, %arg2: i32, %arg3: memref<1x18x16x12xf32, #tpu.memory_space<vmem>>, %arg4: memref<3x12x128xf32, #tpu.memory_space<vmem>>, %arg5: memref<1x128xf32, #tpu.memory_space<vmem>>, %arg6: memref<1x256x128xf32, #tpu.memory_space<vmem>>, %arg7: memref<256x128xf32, #tpu.memory_space<vmem>>) attributes {dimension_semantics = [#tpu.dimension_semantics<parallel>, #tpu.dimension_semantics<parallel>, #tpu.dimension_semantics<arbitrary>], iteration_bounds = array<i64: 2, 1, 1>, scalar_prefetch = 0 : i64, scratch_operands = 1 : i64, tpu.core_type = #tpu.core_type<tc>, window_params = [{transform_indices = @transform_0, window_bounds = array<i64: 1, 18, 16, 12>}, {transform_indices = @transform_1, window_bounds = array<i64: 3, 12, 128>}, {transform_indices = @transform_2, window_bounds = array<i64: 1, 128>}, {transform_indices = @transform_3, window_bounds = array<i64: 1, 256, 128>}]} {
    %c0 = arith.constant 0 : index
    %c0_0 = arith.constant 0 : index
    %c0_1 = arith.constant 0 : index
    %c0_2 = arith.constant 0 : index
    %0 = vector.load %arg3[%c0, %c0_0, %c0_1, %c0_2] : memref<1x18x16x12xf32, #tpu.memory_space<vmem>>, vector<1x16x16x12xf32>
    %1 = vector.shape_cast %0 : vector<1x16x16x12xf32> to vector<16x16x12xf32>
    %2 = vector.shape_cast %1 : vector<16x16x12xf32> to vector<256x12xf32>
    %c0_3 = arith.constant 0 : index
    %c0_4 = arith.constant 0 : index
    %c0_5 = arith.constant 0 : index
    %3 = vector.load %arg4[%c0_3, %c0_4, %c0_5] : memref<3x12x128xf32, #tpu.memory_space<vmem>>, vector<1x12x128xf32>
    %4 = vector.shape_cast %3 : vector<1x12x128xf32> to vector<12x128xf32>
    %cst = arith.constant dense<0.000000e+00> : vector<256x128xf32>
    %5 = tpu.matmul %2, %4, %cst {dimension_numbers = #tpu.dot_dimension_numbers<[1], [0], [0], [1], [0, 0, 1, 1], [], []>} : vector<256x12xf32>, vector<12x128xf32>, vector<256x128xf32> -> vector<256x128xf32>
    %c0_6 = arith.constant 0 : index
    %c0_7 = arith.constant 0 : index
    %6 = vector.load %arg5[%c0_6, %c0_7] : memref<1x128xf32, #tpu.memory_space<vmem>>, vector<1x128xf32>
    %7 = vector.broadcast %6 : vector<1x128xf32> to vector<256x128xf32>
    %8 = arith.addf %5, %7 : vector<256x128xf32>
    %c0_8 = arith.constant 0 : index
    %c0_9 = arith.constant 0 : index
    %9 = vector.load %arg7[%c0_8, %c0_9] : memref<256x128xf32, #tpu.memory_space<vmem>>, vector<256x128xf32>
    tpu.vector_store %arg7[%c0_8, %c0_9], %8 {strides = array<i32>} : memref<256x128xf32, #tpu.memory_space<vmem>>, vector<256x128xf32>,
    %c0_10 = arith.constant 0 : index
    %c1 = arith.constant 1 : index
    %c0_11 = arith.constant 0 : index
    %c0_12 = arith.constant 0 : index
    %10 = vector.load %arg3[%c0_10, %c1, %c0_11, %c0_12] : memref<1x18x16x12xf32, #tpu.memory_space<vmem>>, vector<1x16x16x12xf32>
    %11 = vector.shape_cast %10 : vector<1x16x16x12xf32> to vector<16x16x12xf32>
    %12 = vector.shape_cast %11 : vector<16x16x12xf32> to vector<256x12xf32>
    %c1_13 = arith.constant 1 : index
    %c0_14 = arith.constant 0 : index
    %c0_15 = arith.constant 0 : index
    %13 = vector.load %arg4[%c1_13, %c0_14, %c0_15] : memref<3x12x128xf32, #tpu.memory_space<vmem>>, vector<1x12x128xf32>
    %14 = vector.shape_cast %13 : vector<1x12x128xf32> to vector<12x128xf32>
    %cst_16 = arith.constant dense<0.000000e+00> : vector<256x128xf32>
    %15 = tpu.matmul %12, %14, %cst_16 {dimension_numbers = #tpu.dot_dimension_numbers<[1], [0], [0], [1], [0, 0, 1, 1], [], []>} : vector<256x12xf32>, vector<12x128xf32>, vector<256x128xf32> -> vector<256x128xf32>
    %c0_17 = arith.constant 0 : index
    %c0_18 = arith.constant 0 : index
    %16 = vector.load %arg7[%c0_17, %c0_18] : memref<256x128xf32, #tpu.memory_space<vmem>>, vector<256x128xf32>
    %17 = arith.addf %16, %15 : vector<256x128xf32>
    %c0_19 = arith.constant 0 : index
    %c0_20 = arith.constant 0 : index
    %18 = vector.load %arg7[%c0_19, %c0_20] : memref<256x128xf32, #tpu.memory_space<vmem>>, vector<256x128xf32>
    tpu.vector_store %arg7[%c0_19, %c0_20], %17 {strides = array<i32>} : memref<256x128xf32, #tpu.memory_space<vmem>>, vector<256x128xf32>,
    %c0_21 = arith.constant 0 : index
    %c2 = arith.constant 2 : index
    %c0_22 = arith.constant 0 : index
    %c0_23 = arith.constant 0 : index
    %19 = vector.load %arg3[%c0_21, %c2, %c0_22, %c0_23] : memref<1x18x16x12xf32, #tpu.memory_space<vmem>>, vector<1x16x16x12xf32>
    %20 = vector.shape_cast %19 : vector<1x16x16x12xf32> to vector<16x16x12xf32>
    %21 = vector.shape_cast %20 : vector<16x16x12xf32> to vector<256x12xf32>
    %c2_24 = arith.constant 2 : index
    %c0_25 = arith.constant 0 : index
    %c0_26 = arith.constant 0 : index
    %22 = vector.load %arg4[%c2_24, %c0_25, %c0_26] : memref<3x12x128xf32, #tpu.memory_space<vmem>>, vector<1x12x128xf32>
    %23 = vector.shape_cast %22 : vector<1x12x128xf32> to vector<12x128xf32>
    %cst_27 = arith.constant dense<0.000000e+00> : vector<256x128xf32>
    %24 = tpu.matmul %21, %23, %cst_27 {dimension_numbers = #tpu.dot_dimension_numbers<[1], [0], [0], [1], [0, 0, 1, 1], [], []>} : vector<256x12xf32>, vector<12x128xf32>, vector<256x128xf32> -> vector<256x128xf32>
    %c0_28 = arith.constant 0 : index
    %c0_29 = arith.constant 0 : index
    %25 = vector.load %arg7[%c0_28, %c0_29] : memref<256x128xf32, #tpu.memory_space<vmem>>, vector<256x128xf32>
    %26 = arith.addf %25, %24 : vector<256x128xf32>
    %c0_30 = arith.constant 0 : index
    %c0_31 = arith.constant 0 : index
    %27 = vector.load %arg7[%c0_30, %c0_31] : memref<256x128xf32, #tpu.memory_space<vmem>>, vector<256x128xf32>
    tpu.vector_store %arg7[%c0_30, %c0_31], %26 {strides = array<i32>} : memref<256x128xf32, #tpu.memory_space<vmem>>, vector<256x128xf32>,
    %c0_32 = arith.constant 0 : index
    %c0_33 = arith.constant 0 : index
    %28 = vector.load %arg7[%c0_32, %c0_33] : memref<256x128xf32, #tpu.memory_space<vmem>>, vector<256x128xf32>
    %c0_34 = arith.constant 0 : index
    %c0_35 = arith.constant 0 : index
    %c0_36 = arith.constant 0 : index
    %29 = vector.load %arg6[%c0_34, %c0_35, %c0_36] : memref<1x256x128xf32, #tpu.memory_space<vmem>>, vector<1x256x128xf32>
    %30 = vector.shape_cast %29 : vector<1x256x128xf32> to vector<256x128xf32>
    %31 = vector.shape_cast %28 : vector<256x128xf32> to vector<1x256x128xf32>
    tpu.vector_store %arg6[%c0_34, %c0_35, %c0_36], %31 {strides = array<i32>} : memref<1x256x128xf32, #tpu.memory_space<vmem>>, vector<1x256x128xf32>,
    return
  }
  func.func @transform_0(%arg0: i32, %arg1: i32, %arg2: i32) -> (i32, i32, i32, i32) {
    %c0_i32 = arith.constant 0 : i32
    %c0_i32_0 = arith.constant 0 : i32
    %c0_i32_1 = arith.constant 0 : i32
    return %arg0, %arg1, %c0_i32, %c0_i32_0 : i32, i32, i32, i32
  }
  func.func @transform_1(%arg0: i32, %arg1: i32, %arg2: i32) -> (i32, i32, i32) {
    %c0_i32 = arith.constant 0 : i32
    %c0_i32_0 = arith.constant 0 : i32
    %c0_i32_1 = arith.constant 0 : i32
    return %c0_i32, %c0_i32_0, %arg2 : i32, i32, i32
  }
  func.func @transform_2(%arg0: i32, %arg1: i32, %arg2: i32) -> (i32, i32) {
    %c0_i32 = arith.constant 0 : i32
    %c0_i32_0 = arith.constant 0 : i32
    return %c0_i32, %arg2 : i32, i32
  }
  func.func @transform_3(%arg0: i32, %arg1: i32, %arg2: i32) -> (i32, i32, i32) {
    %c0_i32 = arith.constant 0 : i32
    return %arg0, %arg1, %arg2 : i32, i32, i32
  }
}

</mosaic_0001>

<llo_original>
// kernel: tpu_custom_call.1
$region0: #{tpu_custom_call.1}
  #allocation0 [shape = 'u32[]', space=smem, size = 0x4, offset = 0x4, fixed_abs, tag = 'smem constant byte address 0x4 - core index']
  #allocation1 [shape = 'u32[144,128]{1,0:T(1,128)}', space=vmem, size = 0x12000, scoped, tag = 'internal scratch']
  #allocation2 [shape = 'f32[256,128]{1,0:T(8,128)}', space=vmem, size = 0x20000, scoped, tag = 'scratch operand']
  %s0 = inlined_call_operand.vmem [shape: f32[2,18,16,12], index: 0, kind: input, shape index: {}]
  %s1 = inlined_call_operand.vmem [shape: f32[3,12,128], index: 1, kind: input, shape index: {}]
  %s2 = inlined_call_operand.vmem [shape: f32[1,128], index: 2, kind: input, shape index: {}]
  %s3 = inlined_call_operand.hbm [shape: f32[2,256,128], index: 3, kind: output, shape index: {}]
  %s4 = sld [smem:[#allocation0]]
  $region45: #{tpu_custom_call.1} parent=0
    _
  %s6 = ssub.s32 1, %s4
  %s7 = scalar_select 0, %s6, %s4
  $region1: #{tpu_custom_call.1} parent=0
    #allocation3 [shape = 'u8[262144]{0}', space=vmem, size = 0x40000, scoped, tag = 'output window, operand 0']
    #allocation4 [shape = 's32[2]{0}', space=sflag, size = 0x8, scoped, tag = 'scoped memory for tpu_custom_call.1']
    %8 = vsyncpa [#allocation4], 0
    %s9 = scalar_lea.sflag [#allocation4], 1
    %10 = vsyncpa %s9, 0
    loop: start=0, step=1, limit=4
    $region2: #{tpu_custom_call.1} parent=1 // loop_pre_header
      _
    $region3: #{tpu_custom_call.1} parent=1 // loop_header
      %s12 = sphi 0, %s16
      %p13 = scmp.ge.s32.totalorder %s12, 4
      %s19 = sphi 0, %s38
      %s20 = sphi 0, %s34
      %s21 = sphi 0, %s30
      %s22 = sphi 0, %s19
      %s23 = sphi 0, %s20
      %s24 = sphi 0, %s21
      %s25 = sphi 0, %s22
      %s26 = sphi 0, %s23
      %s27 = sphi 0, %s24
      %s43 = sphi 0, %s45
      %s46 = sphi 0, %s43
      %s47 = sphi 0, %s46
      %s63 = sphi 0, %s47
      %s69 = sphi 0, %s71
      %s72 = sphi 0, %s69
      %s73 = sphi 0, %s72
      %s89 = sphi 0, %s73
      %s95 = sphi 0, %s97
      %s98 = sphi 0, %s95
      %s99 = sphi 0, %s98
      %s115 = sphi 0, %s99
      %s125 = sphi 0, %s127
      %s128 = sphi 0, %s125
      %s129 = sphi 0, %s128
      %s145 = sphi 0, %s129
    $region4: #{tpu_custom_call.1} parent=1 // loop_header_branch
      %15 = sbr.rel (%p13) target = $region8
    $region5: #{tpu_custom_call.1} parent=1 // loop_body
      %s17 = ssub.s32 %s12, 1
      %s18 = ssub.s32 %s12, 2
      %s28 = sadd.s32 1, %s21
      %p29 = scmp.ge.s32.totalorder %s28, 1
      %s30 = scalar_select %p29, 0, %s28
      %s31 = sadd.s32 1, %s20
      %s32 = scalar_select %p29, %s31, %s20
      %p33 = scmp.ge.s32.totalorder %s32, 1
      %s34 = scalar_select %p33, 0, %s32
      %s35 = sadd.s32 1, %s19
      %s36 = scalar_select %p33, %s35, %s19
      %p37 = scmp.ge.s32.totalorder %s36, 2
      %s38 = scalar_select %p37, 0, %s36
      %s39 = ssub.s32 %s19, %s38
      %s40 = ssub.s32 %s20, %s34
      %s41 = sor.u32 %s39, %s40
      %p42 = scmp.eq.s32.totalorder %s41, 0
      %s44 = sadd.s32 %s43, 1
      %s45 = scalar_select %p42, %s43, %s44
      %p48 = pneg %p42
      %p49 = scmp.eq.s32.totalorder %s12, 1
      %p50 = por %p48, %p49
      %p51 = scmp.ne.s32.totalorder %s43, %s46
      %p52 = scmp.eq.s32.totalorder %s12, 0
      %p53 = por %p51, %p52
      %p54 = scmp.ne.s32.totalorder %s43, %s46
      %p55 = scmp.eq.s32.totalorder %s17, 1
      %p56 = por %p54, %p55
      %p57 = scmp.ne.s32.totalorder %s46, %s47
      %p58 = scmp.eq.s32.totalorder %s17, 0
      %p59 = por %p57, %p58
      %p60 = scmp.ne.s32.totalorder %s46, %s47
      %p61 = scmp.eq.s32.totalorder %s18, 1
      %p62 = por %p60, %p61
      %p64 = scmp.ne.s32.totalorder %s47, %s63
      %p65 = scmp.eq.s32.totalorder %s18, 0
      %p66 = por %p64, %p65
      %s67 = ssub.s32 %s21, %s30
      %p68 = scmp.eq.s32.totalorder %s67, 0
      %s70 = sadd.s32 %s69, 1
      %s71 = scalar_select %p68, %s69, %s70
      %p74 = pneg %p68
      %p75 = scmp.eq.s32.totalorder %s12, 1
      %p76 = por %p74, %p75
      %p77 = scmp.ne.s32.totalorder %s69, %s72
      %p78 = scmp.eq.s32.totalorder %s12, 0
      %p79 = por %p77, %p78
      %p80 = scmp.ne.s32.totalorder %s69, %s72
      %p81 = scmp.eq.s32.totalorder %s17, 1
      %p82 = por %p80, %p81
      %p83 = scmp.ne.s32.totalorder %s72, %s73
      %p84 = scmp.eq.s32.totalorder %s17, 0
      %p85 = por %p83, %p84
      %p86 = scmp.ne.s32.totalorder %s72, %s73
      %p87 = scmp.eq.s32.totalorder %s18, 1
      %p88 = por %p86, %p87
      %p90 = scmp.ne.s32.totalorder %s73, %s89
      %p91 = scmp.eq.s32.totalorder %s18, 0
      %p92 = por %p90, %p91
      %s93 = ssub.s32 %s21, %s30
      %p94 = scmp.eq.s32.totalorder %s93, 0
      %s96 = sadd.s32 %s95, 1
      %s97 = scalar_select %p94, %s95, %s96
      %p100 = pneg %p94
      %p101 = scmp.eq.s32.totalorder %s12, 1
      %p102 = por %p100, %p101
      %p103 = scmp.ne.s32.totalorder %s95, %s98
      %p104 = scmp.eq.s32.totalorder %s12, 0
      %p105 = por %p103, %p104
      %p106 = scmp.ne.s32.totalorder %s95, %s98
      %p107 = scmp.eq.s32.totalorder %s17, 1
      %p108 = por %p106, %p107
      %p109 = scmp.ne.s32.totalorder %s98, %s99
      %p110 = scmp.eq.s32.totalorder %s17, 0
      %p111 = por %p109, %p110
      %p112 = scmp.ne.s32.totalorder %s98, %s99
      %p113 = scmp.eq.s32.totalorder %s18, 1
      %p114 = por %p112, %p113
      %p116 = scmp.ne.s32.totalorder %s99, %s115
      %p117 = scmp.eq.s32.totalorder %s18, 0
      %p118 = por %p116, %p117
      %s119 = ssub.s32 %s19, %s38
      %s120 = ssub.s32 %s20, %s34
      %s121 = sor.u32 %s119, %s120
      %s122 = ssub.s32 %s21, %s30
      %s123 = sor.u32 %s121, %s122
      %p124 = scmp.eq.s32.totalorder %s123, 0
      %s126 = sadd.s32 %s125, 1
      %s127 = scalar_select %p124, %s125, %s126
      %p130 = pneg %p124
      %p131 = scmp.eq.s32.totalorder %s12, 1
      %p132 = por %p130, %p131
      %p133 = scmp.ne.s32.totalorder %s125, %s128
      %p134 = scmp.eq.s32.totalorder %s12, 0
      %p135 = por %p133, %p134
      %p136 = scmp.ne.s32.totalorder %s125, %s128
      %p137 = scmp.eq.s32.totalorder %s17, 1
      %p138 = por %p136, %p137
      %p139 = scmp.ne.s32.totalorder %s128, %s129
      %p140 = scmp.eq.s32.totalorder %s17, 0
      %p141 = por %p139, %p140
      %p142 = scmp.ne.s32.totalorder %s128, %s129
      %p143 = scmp.eq.s32.totalorder %s18, 1
      %p144 = por %p142, %p143
      %p146 = scmp.ne.s32.totalorder %s129, %s145
      %p147 = scmp.eq.s32.totalorder %s18, 0
      %p148 = por %p146, %p147
      %p149 = scmp.le.s32.totalorder 1, %s12
      %p150 = scmp.lt.s32.totalorder %s12, 3
      %p151 = pnand %p149, %p150
      %p152 = pneg %p151
      // Predicated region
      $region9: #{tpu_custom_call.1} parent=5 // pred_check
        _
      $region10: #{tpu_custom_call.1} parent=5 // pred_check_branch
        %154 = sbr.rel (%p151) target = $region12
      $region11: #{tpu_custom_call.1} parent=5 // pred_region
        %s155 = ssub.s32 %s12, 1
        // Predicated region
        $region13: #{tpu_custom_call.1} parent=11 // pred_check
          %p156 = pneg %p85
        $region14: #{tpu_custom_call.1} parent=11 // pred_check_branch
          %158 = sbr.rel (%p156) target = $region16
        $region15: #{tpu_custom_call.1} parent=11 // pred_region
          %p159 = scmp.lt.s32.totalorder %s24, 0
          %s160 = scalar_select %p159, %s24, 0
          %s161 = smul.addr %s160, 8
          %s162 = scalar_lea.vmem %s1, %s161
        $region16: #{tpu_custom_call.1} parent=11 // pred_fallthru
          _
        // Predicated region
        $region17: #{tpu_custom_call.1} parent=11 // pred_check
          %p163 = pneg %p111
        $region18: #{tpu_custom_call.1} parent=11 // pred_check_branch
          %165 = sbr.rel (%p163) target = $region20
        $region19: #{tpu_custom_call.1} parent=11 // pred_region
          %p166 = scmp.lt.s32.totalorder %s24, 0
          %s167 = scalar_select %p166, %s24, 0
          %s168 = scalar_lea.vmem %s2, %s167
        $region20: #{tpu_custom_call.1} parent=11 // pred_fallthru
          _
      $region12: #{tpu_custom_call.1} parent=5 // pred_fallthru
        _
      %p169 = scmp.lt.s32.totalorder %s12, 2
      // Predicated region
      $region21: #{tpu_custom_call.1} parent=5 // pred_check
        %p170 = pneg %p169
      $region22: #{tpu_custom_call.1} parent=5 // pred_check_branch
        %172 = sbr.rel (%p170) target = $region24
      $region23: #{tpu_custom_call.1} parent=5 // pred_region
        // Predicated region
        $region25: #{tpu_custom_call.1} parent=23 // pred_check
          %p173 = pneg %p53
        $region26: #{tpu_custom_call.1} parent=23 // pred_check_branch
          %175 = sbr.rel (%p173) target = $region28
        $region27: #{tpu_custom_call.1} parent=23 // pred_region
          %s176 = smul.u32 18, %s20
          %p177 = scmp.lt.s32.totalorder %s19, 1
          %s178 = scalar_select %p177, %s19, 1
          %p179 = scmp.lt.s32.totalorder %s176, 17
          %s180 = scalar_select %p179, %s176, 17
          %s181 = smul.addr %s180, 2
          %s182 = smul.addr %s178, 36
          %s183 = sadd.s32 %s181, %s182
          %s184 = smul.addr %s183, 8
          %s185 = scalar_lea.vmem %s0, %s184
          %s186 = smul.u32 18, %s20
        $region28: #{tpu_custom_call.1} parent=23 // pred_fallthru
          _
      $region24: #{tpu_custom_call.1} parent=5 // pred_fallthru
        _
      %p187 = scmp.le.s32.totalorder 1, %s12
      %p188 = scmp.lt.s32.totalorder %s12, 3
      %p189 = pnand %p187, %p188
      %p190 = pneg %p189
      // Predicated region
      $region29: #{tpu_custom_call.1} parent=5 // pred_check
        _
      $region30: #{tpu_custom_call.1} parent=5 // pred_check_branch
        %192 = sbr.rel (%p189) target = $region32
      $region31: #{tpu_custom_call.1} parent=5 // pred_region
        %s193 = ssub.s32 %s12, 1
        %s194 = smul.u32 18, %s23
        %p195 = scmp.lt.s32.totalorder %s22, 1
        %s196 = scalar_select %p195, %s22, 1
        %p197 = scmp.lt.s32.totalorder %s194, 17
        %s198 = scalar_select %p197, %s194, 17
        %s199 = smul.addr %s198, 2
        %s200 = smul.addr %s196, 36
        %s201 = sadd.s32 %s199, %s200
        %s202 = smul.addr %s201, 8
        %s203 = scalar_lea.vmem %s0, %s202
        %p204 = pneg %p59
        %p205 = pneg %p56
        %p206 = scmp.lt.s32.totalorder %s24, 0
        %s207 = scalar_select %p206, %s24, 0
        %s208 = smul.addr %s207, 8
        %s209 = scalar_lea.vmem %s1, %s208
        %p210 = pneg %p85
        %p211 = pneg %p82
        %p212 = scmp.lt.s32.totalorder %s24, 0
        %s213 = scalar_select %p212, %s24, 0
        %s214 = scalar_lea.vmem %s2, %s213
        %p215 = pneg %p111
        %p216 = pneg %p108
        %p217 = pneg %p141
        %p218 = pneg %p138
        %s219 = sand.u32 %s128, 1
        %s220 = scalar_lea.sflag [#allocation4], %s219
        %s221 = sand.u32 %s128, 1
        %s222 = smul.addr %s221, 256
        %s223 = scalar_lea.vmem [#allocation3], %s222
        %s224 = smul.u32 18, %s23
        %p225 = scmp.lt.s32.totalorder %s22, 1
        %s226 = scalar_select %p225, %s22, 1
        %p227 = scmp.lt.s32.totalorder %s224, 17
        %s228 = scalar_select %p227, %s224, 17
        %s229 = smul.addr %s228, 2
        %s230 = smul.addr %s226, 36
        %s231 = sadd.s32 %s229, %s230
        %s232 = smul.addr %s231, 8
        %s233 = scalar_lea.vmem %s0, %s232
        %s234 = smul.u32 18, %s23
        %p235 = scmp.lt.s32.totalorder %s24, 0
        %s236 = scalar_select %p235, %s24, 0
        %s237 = smul.addr %s236, 8
        %s238 = scalar_lea.vmem %s1, %s237
        %p239 = scmp.lt.s32.totalorder %s24, 0
        %s240 = scalar_select %p239, %s24, 0
        %s241 = scalar_lea.vmem %s2, %s240
        %s242 = smul.u32 32, %s23
        %v243 = vld [vmem:[%s233] sm:$0xff]
        %v244 = vld [vmem:[%s233 + $0x8] sm:$0xff]
        %v245 = vld [vmem:[%s233 + $0x10] sm:$0xff]
        %v246 = vld [vmem:[%s233 + $0x18] sm:$0xff]
        %v247 = vld [vmem:[%s233 + $0x20] sm:$0xff]
        %v248 = vld [vmem:[%s233 + $0x28] sm:$0xff]
        %v249 = vld [vmem:[%s233 + $0x30] sm:$0xff]
        %v250 = vld [vmem:[%s233 + $0x38] sm:$0xff]
        %v251 = vld [vmem:[%s233 + $0x40] sm:$0xff]
        %v252 = vld [vmem:[%s233 + $0x48] sm:$0xff]
        %v253 = vld [vmem:[%s233 + $0x50] sm:$0xff]
        %v254 = vld [vmem:[%s233 + $0x58] sm:$0xff]
        %v255 = vld [vmem:[%s233 + $0x60] sm:$0xff]
        %v256 = vld [vmem:[%s233 + $0x68] sm:$0xff]
        %v257 = vld [vmem:[%s233 + $0x70] sm:$0xff]
        %v258 = vld [vmem:[%s233 + $0x78] sm:$0xff]
        %v259 = vld [vmem:[%s233 + $0x80] sm:$0xff]
        %v260 = vld [vmem:[%s233 + $0x88] sm:$0xff]
        %v261 = vld [vmem:[%s233 + $0x90] sm:$0xff]
        %v262 = vld [vmem:[%s233 + $0x98] sm:$0xff]
        %v263 = vld [vmem:[%s233 + $0xa0] sm:$0xff]
        %v264 = vld [vmem:[%s233 + $0xa8] sm:$0xff]
        %v265 = vld [vmem:[%s233 + $0xb0] sm:$0xff]
        %v266 = vld [vmem:[%s233 + $0xb8] sm:$0xff]
        %v267 = vld [vmem:[%s233 + $0xc0] sm:$0xff]
        %v268 = vld [vmem:[%s233 + $0xc8] sm:$0xff]
        %v269 = vld [vmem:[%s233 + $0xd0] sm:$0xff]
        %v270 = vld [vmem:[%s233 + $0xd8] sm:$0xff]
        %v271 = vld [vmem:[%s233 + $0xe0] sm:$0xff]
        %v272 = vld [vmem:[%s233 + $0xe8] sm:$0xff]
        %v273 = vld [vmem:[%s233 + $0xf0] sm:$0xff]
        %v274 = vld [vmem:[%s233 + $0xf8] sm:$0xff]
        %v275 = vld [vmem:[%s238] sm:$0xff]
        %v276 = vld [vmem:[%s238 + $0x8] sm:$0xf]
        %v277 = vld [vmem:[%s241] sm:$0x1]
        %v279 = vlaneseq
        %v280 = vshrl.u32 %v279, 7
        %v281 = vsub.s32 0, %v280
        %v282 = vrot.slane %v277, %v281
        %vm284 = vcmask 97280
        %v286 = vsel %vm284, %v243, 0
        %v289 = vsel %vm284, %v244, 0
        %v292 = vsel %vm284, %v245, 0
        %v295 = vsel %vm284, %v246, 0
        %v298 = vsel %vm284, %v247, 0
        %v301 = vsel %vm284, %v248, 0
        %v304 = vsel %vm284, %v249, 0
        %v307 = vsel %vm284, %v250, 0
        %v310 = vsel %vm284, %v251, 0
        %v313 = vsel %vm284, %v252, 0
        %v316 = vsel %vm284, %v253, 0
        %v319 = vsel %vm284, %v254, 0
        %v322 = vsel %vm284, %v255, 0
        %v325 = vsel %vm284, %v256, 0
        %v328 = vsel %vm284, %v257, 0
        %v331 = vsel %vm284, %v258, 0
        %v334 = vsel %vm284, %v259, 0
        %v337 = vsel %vm284, %v260, 0
        %v340 = vsel %vm284, %v261, 0
        %v343 = vsel %vm284, %v262, 0
        %v346 = vsel %vm284, %v263, 0
        %v349 = vsel %vm284, %v264, 0
        %v352 = vsel %vm284, %v265, 0
        %v355 = vsel %vm284, %v266, 0
        %v358 = vsel %vm284, %v267, 0
        %v361 = vsel %vm284, %v268, 0
        %v364 = vsel %vm284, %v269, 0
        %v367 = vsel %vm284, %v270, 0
        %v370 = vsel %vm284, %v271, 0
        %v373 = vsel %vm284, %v272, 0
        %v376 = vsel %vm284, %v273, 0
        %v379 = vsel %vm284, %v274, 0
        %vm381 = vcmask 1043456
        %v383 = vsel %vm381, %v276, 0
        %385 = vmatprep.subr.mxu0 0.0
        %386 = vmatpush1.msra.mxu0 0.0
        %387 = vmatprep.subr.mxu0 0.0
        %388 = vmatpush1.msra.mxu0 0.0
        %389 = vmatprep.subr.mxu0 0.0
        %390 = vmatpush1.msra.mxu0 0.0
        %391 = vmatprep.subr.mxu0 0.0
        %392 = vmatpush1.msra.mxu0 0.0
        %393 = vmatprep.subr.mxu0 0.0
        %394 = vmatpush1.msra.mxu0 0.0
        %395 = vmatprep.subr.mxu0 0.0
        %396 = vmatpush1.msra.mxu0 0.0
        %397 = vmatprep.subr.mxu0 0.0
        %398 = vmatpush1.msra.mxu0 0.0
        %399 = vmatprep.subr.mxu0 0.0
        %400 = vmatpush1.msra.mxu0 0.0
        %401 = vmatprep.subr.mxu0 0.0
        %402 = vmatpush1.msra.mxu0 0.0
        %403 = vmatprep.subr.mxu0 0.0
        %404 = vmatpush1.msra.mxu0 0.0
        %405 = vmatprep.subr.mxu0 0.0
        %406 = vmatpush1.msra.mxu0 0.0
        %407 = vmatprep.subr.mxu0 0.0
        %408 = vmatpush1.msra.mxu0 0.0
        %409 = vmatprep.subr.mxu0 0.0
        %410 = vmatpush1.msra.mxu0 0.0
        %411 = vmatprep.subr.mxu0 0.0
        %412 = vmatpush1.msra.mxu0 0.0
        %413 = vmatprep.subr.mxu0 0.0
        %414 = vmatpush1.msra.mxu0 %v383
        %415 = vmatprep.subr.mxu0 0.0
        %416 = vmatpush1.msra.mxu0 %v275
        %417 = vmatprep.subr.mxu0 0.0
        %418 = vmatpush2.msra.mxu0 0.0
        %419 = vmatprep.subr.mxu0 0.0
        %420 = vmatpush2.msra.mxu0 0.0
        %421 = vmatprep.subr.mxu0 0.0
        %422 = vmatpush2.msra.mxu0 0.0
        %423 = vmatprep.subr.mxu0 0.0
        %424 = vmatpush2.msra.mxu0 0.0
        %425 = vmatprep.subr.mxu0 0.0
        %426 = vmatpush2.msra.mxu0 0.0
        %427 = vmatprep.subr.mxu0 0.0
        %428 = vmatpush2.msra.mxu0 0.0
        %429 = vmatprep.subr.mxu0 0.0
        %430 = vmatpush2.msra.mxu0 0.0
        %431 = vmatprep.subr.mxu0 0.0
        %432 = vmatpush2.msra.mxu0 0.0
        %433 = vmatprep.subr.mxu0 0.0
        %434 = vmatpush2.msra.mxu0 0.0
        %435 = vmatprep.subr.mxu0 0.0
        %436 = vmatpush2.msra.mxu0 0.0
        %437 = vmatprep.subr.mxu0 0.0
        %438 = vmatpush2.msra.mxu0 0.0
        %439 = vmatprep.subr.mxu0 0.0
        %440 = vmatpush2.msra.mxu0 0.0
        %441 = vmatprep.subr.mxu0 0.0
        %442 = vmatpush2.msra.mxu0 0.0
        %443 = vmatprep.subr.mxu0 0.0
        %444 = vmatpush2.msra.mxu0 0.0
        %445 = vmatprep.subr.mxu0 0.0
        %446 = vmatpush2.msra.mxu0 0.0
        %447 = vmatprep.subr.mxu0 0.0
        %448 = vmatpush2.msra.mxu0 0.0
        %449 = vmatprep.mubr.f32.mxu0 0.0
        %450 = vmatmul.mubr.f32.gmra.mxu0 %v286
        %v451 = vpop.f32.mrf.mxu0
        %v452 = vadd.f32 %v282, %v451
        %v453 = vpop.f32.mrf.mxu0
        %454 = vmatprep.mubr.f32.mxu0 0.0
        %455 = vmatmul.mubr.f32.gmra.mxu0 %v289
        %v456 = vpop.f32.mrf.mxu0
        %v457 = vadd.f32 %v282, %v456
        %v458 = vpop.f32.mrf.mxu0
        %459 = vmatprep.mubr.f32.mxu0 0.0
        %460 = vmatmul.mubr.f32.gmra.mxu0 %v292
        %v461 = vpop.f32.mrf.mxu0
        %v462 = vadd.f32 %v282, %v461
        %v463 = vpop.f32.mrf.mxu0
        %464 = vmatprep.mubr.f32.mxu0 0.0
        %465 = vmatmul.mubr.f32.gmra.mxu0 %v295
        %v466 = vpop.f32.mrf.mxu0
        %v467 = vadd.f32 %v282, %v466
        %v468 = vpop.f32.mrf.mxu0
        %469 = vmatprep.mubr.f32.mxu0 0.0
        %470 = vmatmul.mubr.f32.gmra.mxu0 %v298
        %v471 = vpop.f32.mrf.mxu0
        %v472 = vadd.f32 %v282, %v471
        %v473 = vpop.f32.mrf.mxu0
        %474 = vmatprep.mubr.f32.mxu0 0.0
        %475 = vmatmul.mubr.f32.gmra.mxu0 %v301
        %v476 = vpop.f32.mrf.mxu0
        %v477 = vadd.f32 %v282, %v476
        %v478 = vpop.f32.mrf.mxu0
        %479 = vmatprep.mubr.f32.mxu0 0.0
        %480 = vmatmul.mubr.f32.gmra.mxu0 %v304
        %v481 = vpop.f32.mrf.mxu0
        %v482 = vadd.f32 %v282, %v481
        %v483 = vpop.f32.mrf.mxu0
        %484 = vmatprep.mubr.f32.mxu0 0.0
        %485 = vmatmul.mubr.f32.gmra.mxu0 %v307
        %v486 = vpop.f32.mrf.mxu0
        %v487 = vadd.f32 %v282, %v486
        %v488 = vpop.f32.mrf.mxu0
        %489 = vmatprep.mubr.f32.mxu0 0.0
        %490 = vmatmul.mubr.f32.gmra.mxu0 %v310
        %v491 = vpop.f32.mrf.mxu0
        %v492 = vadd.f32 %v282, %v491
        %v493 = vpop.f32.mrf.mxu0
        %494 = vmatprep.mubr.f32.mxu0 0.0
        %495 = vmatmul.mubr.f32.gmra.mxu0 %v313
        %v496 = vpop.f32.mrf.mxu0
        %v497 = vadd.f32 %v282, %v496
        %v498 = vpop.f32.mrf.mxu0
        %499 = vmatprep.mubr.f32.mxu0 0.0
        %500 = vmatmul.mubr.f32.gmra.mxu0 %v316
        %v501 = vpop.f32.mrf.mxu0
        %v502 = vadd.f32 %v282, %v501
        %v503 = vpop.f32.mrf.mxu0
        %504 = vmatprep.mubr.f32.mxu0 0.0
        %505 = vmatmul.mubr.f32.gmra.mxu0 %v319
        %v506 = vpop.f32.mrf.mxu0
        %v507 = vadd.f32 %v282, %v506
        %v508 = vpop.f32.mrf.mxu0
        %509 = vmatprep.mubr.f32.mxu0 0.0
        %510 = vmatmul.mubr.f32.gmra.mxu0 %v322
        %v511 = vpop.f32.mrf.mxu0
        %v512 = vadd.f32 %v282, %v511
        %v513 = vpop.f32.mrf.mxu0
        %514 = vmatprep.mubr.f32.mxu0 0.0
        %515 = vmatmul.mubr.f32.gmra.mxu0 %v325
        %v516 = vpop.f32.mrf.mxu0
        %v517 = vadd.f32 %v282, %v516
        %v518 = vpop.f32.mrf.mxu0
        %519 = vmatprep.mubr.f32.mxu0 0.0
        %520 = vmatmul.mubr.f32.gmra.mxu0 %v328
        %v521 = vpop.f32.mrf.mxu0
        %v522 = vadd.f32 %v282, %v521
        %v523 = vpop.f32.mrf.mxu0
        %524 = vmatprep.mubr.f32.mxu0 0.0
        %525 = vmatmul.mubr.f32.gmra.mxu0 %v331
        %v526 = vpop.f32.mrf.mxu0
        %v527 = vadd.f32 %v282, %v526
        %v528 = vpop.f32.mrf.mxu0
        %529 = vmatprep.mubr.f32.mxu0 0.0
        %530 = vmatmul.mubr.f32.gmra.mxu0 %v334
        %v531 = vpop.f32.mrf.mxu0
        %v532 = vadd.f32 %v282, %v531
        %v533 = vpop.f32.mrf.mxu0
        %534 = vmatprep.mubr.f32.mxu0 0.0
        %535 = vmatmul.mubr.f32.gmra.mxu0 %v337
        %v536 = vpop.f32.mrf.mxu0
        %v537 = vadd.f32 %v282, %v536
        %v538 = vpop.f32.mrf.mxu0
        %539 = vmatprep.mubr.f32.mxu0 0.0
        %540 = vmatmul.mubr.f32.gmra.mxu0 %v340
        %v541 = vpop.f32.mrf.mxu0
        %v542 = vadd.f32 %v282, %v541
        %v543 = vpop.f32.mrf.mxu0
        %544 = vmatprep.mubr.f32.mxu0 0.0
        %545 = vmatmul.mubr.f32.gmra.mxu0 %v343
        %v546 = vpop.f32.mrf.mxu0
        %v547 = vadd.f32 %v282, %v546
        %v548 = vpop.f32.mrf.mxu0
        %549 = vmatprep.mubr.f32.mxu0 0.0
        %550 = vmatmul.mubr.f32.gmra.mxu0 %v346
        %v551 = vpop.f32.mrf.mxu0
        %v552 = vadd.f32 %v282, %v551
        %v553 = vpop.f32.mrf.mxu0
        %554 = vmatprep.mubr.f32.mxu0 0.0
        %555 = vmatmul.mubr.f32.gmra.mxu0 %v349
        %v556 = vpop.f32.mrf.mxu0
        %v557 = vadd.f32 %v282, %v556
        %v558 = vpop.f32.mrf.mxu0
        %559 = vmatprep.mubr.f32.mxu0 0.0
        %560 = vmatmul.mubr.f32.gmra.mxu0 %v352
        %v561 = vpop.f32.mrf.mxu0
        %v562 = vadd.f32 %v282, %v561
        %v563 = vpop.f32.mrf.mxu0
        %564 = vmatprep.mubr.f32.mxu0 0.0
        %565 = vmatmul.mubr.f32.gmra.mxu0 %v355
        %v566 = vpop.f32.mrf.mxu0
        %v567 = vadd.f32 %v282, %v566
        %v568 = vpop.f32.mrf.mxu0
        %569 = vmatprep.mubr.f32.mxu0 0.0
        %570 = vmatmul.mubr.f32.gmra.mxu0 %v358
        %v571 = vpop.f32.mrf.mxu0
        %v572 = vadd.f32 %v282, %v571
        %v573 = vpop.f32.mrf.mxu0
        %574 = vmatprep.mubr.f32.mxu0 0.0
        %575 = vmatmul.mubr.f32.gmra.mxu0 %v361
        %v576 = vpop.f32.mrf.mxu0
        %v577 = vadd.f32 %v282, %v576
        %v578 = vpop.f32.mrf.mxu0
        %579 = vmatprep.mubr.f32.mxu0 0.0
        %580 = vmatmul.mubr.f32.gmra.mxu0 %v364
        %v581 = vpop.f32.mrf.mxu0
        %v582 = vadd.f32 %v282, %v581
        %v583 = vpop.f32.mrf.mxu0
        %584 = vmatprep.mubr.f32.mxu0 0.0
        %585 = vmatmul.mubr.f32.gmra.mxu0 %v367
        %v586 = vpop.f32.mrf.mxu0
        %v587 = vadd.f32 %v282, %v586
        %v588 = vpop.f32.mrf.mxu0
        %589 = vmatprep.mubr.f32.mxu0 0.0
        %590 = vmatmul.mubr.f32.gmra.mxu0 %v370
        %v591 = vpop.f32.mrf.mxu0
        %v592 = vadd.f32 %v282, %v591
        %v593 = vpop.f32.mrf.mxu0
        %594 = vmatprep.mubr.f32.mxu0 0.0
        %595 = vmatmul.mubr.f32.gmra.mxu0 %v373
        %v596 = vpop.f32.mrf.mxu0
        %v597 = vadd.f32 %v282, %v596
        %v598 = vpop.f32.mrf.mxu0
        %599 = vmatprep.mubr.f32.mxu0 0.0
        %600 = vmatmul.mubr.f32.gmra.mxu0 %v376
        %v601 = vpop.f32.mrf.mxu0
        %v602 = vadd.f32 %v282, %v601
        %v603 = vpop.f32.mrf.mxu0
        %604 = vmatprep.mubr.f32.mxu0 0.0
        %605 = vmatmul.mubr.f32.gmra.mxu0 %v379
        %v606 = vpop.f32.mrf.mxu0
        %v607 = vadd.f32 %v282, %v606
        %v608 = vpop.f32.mrf.mxu0
        %609 = vdwg.mxu0
        %610 = vst [vmem:[#allocation2] sm:$0xff] %v452
        %611 = vst [vmem:[#allocation2 + $0x8] sm:$0xff] %v457
        %612 = vst [vmem:[#allocation2 + $0x10] sm:$0xff] %v462
        %613 = vst [vmem:[#allocation2 + $0x18] sm:$0xff] %v467
        %614 = vst [vmem:[#allocation2 + $0x20] sm:$0xff] %v472
        %615 = vst [vmem:[#allocation2 + $0x28] sm:$0xff] %v477
        %616 = vst [vmem:[#allocation2 + $0x30] sm:$0xff] %v482
        %617 = vst [vmem:[#allocation2 + $0x38] sm:$0xff] %v487
        %618 = vst [vmem:[#allocation2 + $0x40] sm:$0xff] %v492
        %619 = vst [vmem:[#allocation2 + $0x48] sm:$0xff] %v497
        %620 = vst [vmem:[#allocation2 + $0x50] sm:$0xff] %v502
        %621 = vst [vmem:[#allocation2 + $0x58] sm:$0xff] %v507
        %622 = vst [vmem:[#allocation2 + $0x60] sm:$0xff] %v512
        %623 = vst [vmem:[#allocation2 + $0x68] sm:$0xff] %v517
        %624 = vst [vmem:[#allocation2 + $0x70] sm:$0xff] %v522
        %625 = vst [vmem:[#allocation2 + $0x78] sm:$0xff] %v527
        %626 = vst [vmem:[#allocation2 + $0x80] sm:$0xff] %v532
        %627 = vst [vmem:[#allocation2 + $0x88] sm:$0xff] %v537
        %628 = vst [vmem:[#allocation2 + $0x90] sm:$0xff] %v542
        %629 = vst [vmem:[#allocation2 + $0x98] sm:$0xff] %v547
        %630 = vst [vmem:[#allocation2 + $0xa0] sm:$0xff] %v552
        %631 = vst [vmem:[#allocation2 + $0xa8] sm:$0xff] %v557
        %632 = vst [vmem:[#allocation2 + $0xb0] sm:$0xff] %v562
        %633 = vst [vmem:[#allocation2 + $0xb8] sm:$0xff] %v567
        %634 = vst [vmem:[#allocation2 + $0xc0] sm:$0xff] %v572
        %635 = vst [vmem:[#allocation2 + $0xc8] sm:$0xff] %v577
        %636 = vst [vmem:[#allocation2 + $0xd0] sm:$0xff] %v582
        %637 = vst [vmem:[#allocation2 + $0xd8] sm:$0xff] %v587
        %638 = vst [vmem:[#allocation2 + $0xe0] sm:$0xff] %v592
        %639 = vst [vmem:[#allocation2 + $0xe8] sm:$0xff] %v597
        %640 = vst [vmem:[#allocation2 + $0xf0] sm:$0xff] %v602
        %641 = vst [vmem:[#allocation2 + $0xf8] sm:$0xff] %v607
        %s642 = scalar_lea.vmem %s233, 16
        %v643 = vld [vmem:[%s642] sm:$0xff]
        %v644 = vld [vmem:[%s642 + $0x8] sm:$0xff]
        %v645 = vld [vmem:[%s642 + $0x10] sm:$0xff]
        %v646 = vld [vmem:[%s642 + $0x18] sm:$0xff]
        %v647 = vld [vmem:[%s642 + $0x20] sm:$0xff]
        %v648 = vld [vmem:[%s642 + $0x28] sm:$0xff]
        %v649 = vld [vmem:[%s642 + $0x30] sm:$0xff]
        %v650 = vld [vmem:[%s642 + $0x38] sm:$0xff]
        %v651 = vld [vmem:[%s642 + $0x40] sm:$0xff]
        %v652 = vld [vmem:[%s642 + $0x48] sm:$0xff]
        %v653 = vld [vmem:[%s642 + $0x50] sm:$0xff]
        %v654 = vld [vmem:[%s642 + $0x58] sm:$0xff]
        %v655 = vld [vmem:[%s642 + $0x60] sm:$0xff]
        %v656 = vld [vmem:[%s642 + $0x68] sm:$0xff]
        %v657 = vld [vmem:[%s642 + $0x70] sm:$0xff]
        %v658 = vld [vmem:[%s642 + $0x78] sm:$0xff]
        %v659 = vld [vmem:[%s642 + $0x80] sm:$0xff]
        %v660 = vld [vmem:[%s642 + $0x88] sm:$0xff]
        %v661 = vld [vmem:[%s642 + $0x90] sm:$0xff]
        %v662 = vld [vmem:[%s642 + $0x98] sm:$0xff]
        %v663 = vld [vmem:[%s642 + $0xa0] sm:$0xff]
        %v664 = vld [vmem:[%s642 + $0xa8] sm:$0xff]
        %v665 = vld [vmem:[%s642 + $0xb0] sm:$0xff]
        %v666 = vld [vmem:[%s642 + $0xb8] sm:$0xff]
        %v667 = vld [vmem:[%s642 + $0xc0] sm:$0xff]
        %v668 = vld [vmem:[%s642 + $0xc8] sm:$0xff]
        %v669 = vld [vmem:[%s642 + $0xd0] sm:$0xff]
        %v670 = vld [vmem:[%s642 + $0xd8] sm:$0xff]
        %v671 = vld [vmem:[%s642 + $0xe0] sm:$0xff]
        %v672 = vld [vmem:[%s642 + $0xe8] sm:$0xff]
        %v673 = vld [vmem:[%s642 + $0xf0] sm:$0xff]
        %v674 = vld [vmem:[%s642 + $0xf8] sm:$0xff]
        %s675 = scalar_lea.vmem %s238, 16
        %v676 = vld [vmem:[%s675] sm:$0xff]
        %v677 = vld [vmem:[%s675 + $0x8] sm:$0xf]
        %v679 = vsel %vm284, %v643, 0
        %v682 = vsel %vm284, %v644, 0
        %v685 = vsel %vm284, %v645, 0
        %v688 = vsel %vm284, %v646, 0
        %v691 = vsel %vm284, %v647, 0
        %v694 = vsel %vm284, %v648, 0
        %v697 = vsel %vm284, %v649, 0
        %v700 = vsel %vm284, %v650, 0
        %v703 = vsel %vm284, %v651, 0
        %v706 = vsel %vm284, %v652, 0
        %v709 = vsel %vm284, %v653, 0
        %v712 = vsel %vm284, %v654, 0
        %v715 = vsel %vm284, %v655, 0
        %v718 = vsel %vm284, %v656, 0
        %v721 = vsel %vm284, %v657, 0
        %v724 = vsel %vm284, %v658, 0
        %v727 = vsel %vm284, %v659, 0
        %v730 = vsel %vm284, %v660, 0
        %v733 = vsel %vm284, %v661, 0
        %v736 = vsel %vm284, %v662, 0
        %v739 = vsel %vm284, %v663, 0
        %v742 = vsel %vm284, %v664, 0
        %v745 = vsel %vm284, %v665, 0
        %v748 = vsel %vm284, %v666, 0
        %v751 = vsel %vm284, %v667, 0
        %v754 = vsel %vm284, %v668, 0
        %v757 = vsel %vm284, %v669, 0
        %v760 = vsel %vm284, %v670, 0
        %v763 = vsel %vm284, %v671, 0
        %v766 = vsel %vm284, %v672, 0
        %v769 = vsel %vm284, %v673, 0
        %v772 = vsel %vm284, %v674, 0
        %v775 = vsel %vm381, %v677, 0
        %777 = vmatprep.subr.mxu0 0.0
        %778 = vmatpush1.msra.mxu0 0.0
        %779 = vmatprep.subr.mxu0 0.0
        %780 = vmatpush1.msra.mxu0 0.0
        %781 = vmatprep.subr.mxu0 0.0
        %782 = vmatpush1.msra.mxu0 0.0
        %783 = vmatprep.subr.mxu0 0.0
        %784 = vmatpush1.msra.mxu0 0.0
        %785 = vmatprep.subr.mxu0 0.0
        %786 = vmatpush1.msra.mxu0 0.0
        %787 = vmatprep.subr.mxu0 0.0
        %788 = vmatpush1.msra.mxu0 0.0
        %789 = vmatprep.subr.mxu0 0.0
        %790 = vmatpush1.msra.mxu0 0.0
        %791 = vmatprep.subr.mxu0 0.0
        %792 = vmatpush1.msra.mxu0 0.0
        %793 = vmatprep.subr.mxu0 0.0
        %794 = vmatpush1.msra.mxu0 0.0
        %795 = vmatprep.subr.mxu0 0.0
        %796 = vmatpush1.msra.mxu0 0.0
        %797 = vmatprep.subr.mxu0 0.0
        %798 = vmatpush1.msra.mxu0 0.0
        %799 = vmatprep.subr.mxu0 0.0
        %800 = vmatpush1.msra.mxu0 0.0
        %801 = vmatprep.subr.mxu0 0.0
        %802 = vmatpush1.msra.mxu0 0.0
        %803 = vmatprep.subr.mxu0 0.0
        %804 = vmatpush1.msra.mxu0 0.0
        %805 = vmatprep.subr.mxu0 0.0
        %806 = vmatpush1.msra.mxu0 %v775
        %807 = vmatprep.subr.mxu0 0.0
        %808 = vmatpush1.msra.mxu0 %v676
        %809 = vmatprep.subr.mxu0 0.0
        %810 = vmatpush2.msra.mxu0 0.0
        %811 = vmatprep.subr.mxu0 0.0
        %812 = vmatpush2.msra.mxu0 0.0
        %813 = vmatprep.subr.mxu0 0.0
        %814 = vmatpush2.msra.mxu0 0.0
        %815 = vmatprep.subr.mxu0 0.0
        %816 = vmatpush2.msra.mxu0 0.0
        %817 = vmatprep.subr.mxu0 0.0
        %818 = vmatpush2.msra.mxu0 0.0
        %819 = vmatprep.subr.mxu0 0.0
        %820 = vmatpush2.msra.mxu0 0.0
        %821 = vmatprep.subr.mxu0 0.0
        %822 = vmatpush2.msra.mxu0 0.0
        %823 = vmatprep.subr.mxu0 0.0
        %824 = vmatpush2.msra.mxu0 0.0
        %825 = vmatprep.subr.mxu0 0.0
        %826 = vmatpush2.msra.mxu0 0.0
        %827 = vmatprep.subr.mxu0 0.0
        %828 = vmatpush2.msra.mxu0 0.0
        %829 = vmatprep.subr.mxu0 0.0
        %830 = vmatpush2.msra.mxu0 0.0
        %831 = vmatprep.subr.mxu0 0.0
        %832 = vmatpush2.msra.mxu0 0.0
        %833 = vmatprep.subr.mxu0 0.0
        %834 = vmatpush2.msra.mxu0 0.0
        %835 = vmatprep.subr.mxu0 0.0
        %836 = vmatpush2.msra.mxu0 0.0
        %837 = vmatprep.subr.mxu0 0.0
        %838 = vmatpush2.msra.mxu0 0.0
        %839 = vmatprep.subr.mxu0 0.0
        %840 = vmatpush2.msra.mxu0 0.0
        %841 = vmatprep.mubr.f32.mxu0 0.0
        %842 = vmatmul.mubr.f32.gmra.mxu0 %v679
        %v843 = vpop.f32.mrf.mxu0
        %v844 = vadd.f32 0.0, %v843
        %v845 = vpop.f32.mrf.mxu0
        %846 = vmatprep.mubr.f32.mxu0 0.0
        %847 = vmatmul.mubr.f32.gmra.mxu0 %v682
        %v848 = vpop.f32.mrf.mxu0
        %v849 = vadd.f32 0.0, %v848
        %v850 = vpop.f32.mrf.mxu0
        %851 = vmatprep.mubr.f32.mxu0 0.0
        %852 = vmatmul.mubr.f32.gmra.mxu0 %v685
        %v853 = vpop.f32.mrf.mxu0
        %v854 = vadd.f32 0.0, %v853
        %v855 = vpop.f32.mrf.mxu0
        %856 = vmatprep.mubr.f32.mxu0 0.0
        %857 = vmatmul.mubr.f32.gmra.mxu0 %v688
        %v858 = vpop.f32.mrf.mxu0
        %v859 = vadd.f32 0.0, %v858
        %v860 = vpop.f32.mrf.mxu0
        %861 = vmatprep.mubr.f32.mxu0 0.0
        %862 = vmatmul.mubr.f32.gmra.mxu0 %v691
        %v863 = vpop.f32.mrf.mxu0
        %v864 = vadd.f32 0.0, %v863
        %v865 = vpop.f32.mrf.mxu0
        %866 = vmatprep.mubr.f32.mxu0 0.0
        %867 = vmatmul.mubr.f32.gmra.mxu0 %v694
        %v868 = vpop.f32.mrf.mxu0
        %v869 = vadd.f32 0.0, %v868
        %v870 = vpop.f32.mrf.mxu0
        %871 = vmatprep.mubr.f32.mxu0 0.0
        %872 = vmatmul.mubr.f32.gmra.mxu0 %v697
        %v873 = vpop.f32.mrf.mxu0
        %v874 = vadd.f32 0.0, %v873
        %v875 = vpop.f32.mrf.mxu0
        %876 = vmatprep.mubr.f32.mxu0 0.0
        %877 = vmatmul.mubr.f32.gmra.mxu0 %v700
        %v878 = vpop.f32.mrf.mxu0
        %v879 = vadd.f32 0.0, %v878
        %v880 = vpop.f32.mrf.mxu0
        %881 = vmatprep.mubr.f32.mxu0 0.0
        %882 = vmatmul.mubr.f32.gmra.mxu0 %v703
        %v883 = vpop.f32.mrf.mxu0
        %v884 = vadd.f32 0.0, %v883
        %v885 = vpop.f32.mrf.mxu0
        %886 = vmatprep.mubr.f32.mxu0 0.0
        %887 = vmatmul.mubr.f32.gmra.mxu0 %v706
        %v888 = vpop.f32.mrf.mxu0
        %v889 = vadd.f32 0.0, %v888
        %v890 = vpop.f32.mrf.mxu0
        %891 = vmatprep.mubr.f32.mxu0 0.0
        %892 = vmatmul.mubr.f32.gmra.mxu0 %v709
        %v893 = vpop.f32.mrf.mxu0
        %v894 = vadd.f32 0.0, %v893
        %v895 = vpop.f32.mrf.mxu0
        %896 = vmatprep.mubr.f32.mxu0 0.0
        %897 = vmatmul.mubr.f32.gmra.mxu0 %v712
        %v898 = vpop.f32.mrf.mxu0
        %v899 = vadd.f32 0.0, %v898
        %v900 = vpop.f32.mrf.mxu0
        %901 = vmatprep.mubr.f32.mxu0 0.0
        %902 = vmatmul.mubr.f32.gmra.mxu0 %v715
        %v903 = vpop.f32.mrf.mxu0
        %v904 = vadd.f32 0.0, %v903
        %v905 = vpop.f32.mrf.mxu0
        %906 = vmatprep.mubr.f32.mxu0 0.0
        %907 = vmatmul.mubr.f32.gmra.mxu0 %v718
        %v908 = vpop.f32.mrf.mxu0
        %v909 = vadd.f32 0.0, %v908
        %v910 = vpop.f32.mrf.mxu0
        %911 = vmatprep.mubr.f32.mxu0 0.0
        %912 = vmatmul.mubr.f32.gmra.mxu0 %v721
        %v913 = vpop.f32.mrf.mxu0
        %v914 = vadd.f32 0.0, %v913
        %v915 = vpop.f32.mrf.mxu0
        %916 = vmatprep.mubr.f32.mxu0 0.0
        %917 = vmatmul.mubr.f32.gmra.mxu0 %v724
        %v918 = vpop.f32.mrf.mxu0
        %v919 = vadd.f32 0.0, %v918
        %v920 = vpop.f32.mrf.mxu0
        %921 = vmatprep.mubr.f32.mxu0 0.0
        %922 = vmatmul.mubr.f32.gmra.mxu0 %v727
        %v923 = vpop.f32.mrf.mxu0
        %v924 = vadd.f32 0.0, %v923
        %v925 = vpop.f32.mrf.mxu0
        %926 = vmatprep.mubr.f32.mxu0 0.0
        %927 = vmatmul.mubr.f32.gmra.mxu0 %v730
        %v928 = vpop.f32.mrf.mxu0
        %v929 = vadd.f32 0.0, %v928
        %v930 = vpop.f32.mrf.mxu0
        %931 = vmatprep.mubr.f32.mxu0 0.0
        %932 = vmatmul.mubr.f32.gmra.mxu0 %v733
        %v933 = vpop.f32.mrf.mxu0
        %v934 = vadd.f32 0.0, %v933
        %v935 = vpop.f32.mrf.mxu0
        %936 = vmatprep.mubr.f32.mxu0 0.0
        %937 = vmatmul.mubr.f32.gmra.mxu0 %v736
        %v938 = vpop.f32.mrf.mxu0
        %v939 = vadd.f32 0.0, %v938
        %v940 = vpop.f32.mrf.mxu0
        %941 = vmatprep.mubr.f32.mxu0 0.0
        %942 = vmatmul.mubr.f32.gmra.mxu0 %v739
        %v943 = vpop.f32.mrf.mxu0
        %v944 = vadd.f32 0.0, %v943
        %v945 = vpop.f32.mrf.mxu0
        %946 = vmatprep.mubr.f32.mxu0 0.0
        %947 = vmatmul.mubr.f32.gmra.mxu0 %v742
        %v948 = vpop.f32.mrf.mxu0
        %v949 = vadd.f32 0.0, %v948
        %v950 = vpop.f32.mrf.mxu0
        %951 = vmatprep.mubr.f32.mxu0 0.0
        %952 = vmatmul.mubr.f32.gmra.mxu0 %v745
        %v953 = vpop.f32.mrf.mxu0
        %v954 = vadd.f32 0.0, %v953
        %v955 = vpop.f32.mrf.mxu0
        %956 = vmatprep.mubr.f32.mxu0 0.0
        %957 = vmatmul.mubr.f32.gmra.mxu0 %v748
        %v958 = vpop.f32.mrf.mxu0
        %v959 = vadd.f32 0.0, %v958
        %v960 = vpop.f32.mrf.mxu0
        %961 = vmatprep.mubr.f32.mxu0 0.0
        %962 = vmatmul.mubr.f32.gmra.mxu0 %v751
        %v963 = vpop.f32.mrf.mxu0
        %v964 = vadd.f32 0.0, %v963
        %v965 = vpop.f32.mrf.mxu0
        %966 = vmatprep.mubr.f32.mxu0 0.0
        %967 = vmatmul.mubr.f32.gmra.mxu0 %v754
        %v968 = vpop.f32.mrf.mxu0
        %v969 = vadd.f32 0.0, %v968
        %v970 = vpop.f32.mrf.mxu0
        %971 = vmatprep.mubr.f32.mxu0 0.0
        %972 = vmatmul.mubr.f32.gmra.mxu0 %v757
        %v973 = vpop.f32.mrf.mxu0
        %v974 = vadd.f32 0.0, %v973
        %v975 = vpop.f32.mrf.mxu0
        %976 = vmatprep.mubr.f32.mxu0 0.0
        %977 = vmatmul.mubr.f32.gmra.mxu0 %v760
        %v978 = vpop.f32.mrf.mxu0
        %v979 = vadd.f32 0.0, %v978
        %v980 = vpop.f32.mrf.mxu0
        %981 = vmatprep.mubr.f32.mxu0 0.0
        %982 = vmatmul.mubr.f32.gmra.mxu0 %v763
        %v983 = vpop.f32.mrf.mxu0
        %v984 = vadd.f32 0.0, %v983
        %v985 = vpop.f32.mrf.mxu0
        %986 = vmatprep.mubr.f32.mxu0 0.0
        %987 = vmatmul.mubr.f32.gmra.mxu0 %v766
        %v988 = vpop.f32.mrf.mxu0
        %v989 = vadd.f32 0.0, %v988
        %v990 = vpop.f32.mrf.mxu0
        %991 = vmatprep.mubr.f32.mxu0 0.0
        %992 = vmatmul.mubr.f32.gmra.mxu0 %v769
        %v993 = vpop.f32.mrf.mxu0
        %v994 = vadd.f32 0.0, %v993
        %v995 = vpop.f32.mrf.mxu0
        %996 = vmatprep.mubr.f32.mxu0 0.0
        %997 = vmatmul.mubr.f32.gmra.mxu0 %v772
        %v998 = vpop.f32.mrf.mxu0
        %v999 = vadd.f32 0.0, %v998
        %v1000 = vpop.f32.mrf.mxu0
        %1001 = vdwg.mxu0
        %v1002 = vld [vmem:[#allocation2] sm:$0xff]
        %v1003 = vld [vmem:[#allocation2 + $0x8] sm:$0xff]
        %v1004 = vld [vmem:[#allocation2 + $0x10] sm:$0xff]
        %v1005 = vld [vmem:[#allocation2 + $0x18] sm:$0xff]
        %v1006 = vld [vmem:[#allocation2 + $0x20] sm:$0xff]
        %v1007 = vld [vmem:[#allocation2 + $0x28] sm:$0xff]
        %v1008 = vld [vmem:[#allocation2 + $0x30] sm:$0xff]
        %v1009 = vld [vmem:[#allocation2 + $0x38] sm:$0xff]
        %v1010 = vld [vmem:[#allocation2 + $0x40] sm:$0xff]
        %v1011 = vld [vmem:[#allocation2 + $0x48] sm:$0xff]
        %v1012 = vld [vmem:[#allocation2 + $0x50] sm:$0xff]
        %v1013 = vld [vmem:[#allocation2 + $0x58] sm:$0xff]
        %v1014 = vld [vmem:[#allocation2 + $0x60] sm:$0xff]
        %v1015 = vld [vmem:[#allocation2 + $0x68] sm:$0xff]
        %v1016 = vld [vmem:[#allocation2 + $0x70] sm:$0xff]
        %v1017 = vld [vmem:[#allocation2 + $0x78] sm:$0xff]
        %v1018 = vld [vmem:[#allocation2 + $0x80] sm:$0xff]
        %v1019 = vld [vmem:[#allocation2 + $0x88] sm:$0xff]
        %v1020 = vld [vmem:[#allocation2 + $0x90] sm:$0xff]
        %v1021 = vld [vmem:[#allocation2 + $0x98] sm:$0xff]
        %v1022 = vld [vmem:[#allocation2 + $0xa0] sm:$0xff]
        %v1023 = vld [vmem:[#allocation2 + $0xa8] sm:$0xff]
        %v1024 = vld [vmem:[#allocation2 + $0xb0] sm:$0xff]
        %v1025 = vld [vmem:[#allocation2 + $0xb8] sm:$0xff]
        %v1026 = vld [vmem:[#allocation2 + $0xc0] sm:$0xff]
        %v1027 = vld [vmem:[#allocation2 + $0xc8] sm:$0xff]
        %v1028 = vld [vmem:[#allocation2 + $0xd0] sm:$0xff]
        %v1029 = vld [vmem:[#allocation2 + $0xd8] sm:$0xff]
        %v1030 = vld [vmem:[#allocation2 + $0xe0] sm:$0xff]
        %v1031 = vld [vmem:[#allocation2 + $0xe8] sm:$0xff]
        %v1032 = vld [vmem:[#allocation2 + $0xf0] sm:$0xff]
        %v1033 = vld [vmem:[#allocation2 + $0xf8] sm:$0xff]
        %v1034 = vadd.f32 %v1002, %v844
        %v1035 = vadd.f32 %v1003, %v849
        %v1036 = vadd.f32 %v1004, %v854
        %v1037 = vadd.f32 %v1005, %v859
        %v1038 = vadd.f32 %v1006, %v864
        %v1039 = vadd.f32 %v1007, %v869
        %v1040 = vadd.f32 %v1008, %v874
        %v1041 = vadd.f32 %v1009, %v879
        %v1042 = vadd.f32 %v1010, %v884
        %v1043 = vadd.f32 %v1011, %v889
        %v1044 = vadd.f32 %v1012, %v894
        %v1045 = vadd.f32 %v1013, %v899
        %v1046 = vadd.f32 %v1014, %v904
        %v1047 = vadd.f32 %v1015, %v909
        %v1048 = vadd.f32 %v1016, %v914
        %v1049 = vadd.f32 %v1017, %v919
        %v1050 = vadd.f32 %v1018, %v924
        %v1051 = vadd.f32 %v1019, %v929
        %v1052 = vadd.f32 %v1020, %v934
        %v1053 = vadd.f32 %v1021, %v939
        %v1054 = vadd.f32 %v1022, %v944
        %v1055 = vadd.f32 %v1023, %v949
        %v1056 = vadd.f32 %v1024, %v954
        %v1057 = vadd.f32 %v1025, %v959
        %v1058 = vadd.f32 %v1026, %v964
        %v1059 = vadd.f32 %v1027, %v969
        %v1060 = vadd.f32 %v1028, %v974
        %v1061 = vadd.f32 %v1029, %v979
        %v1062 = vadd.f32 %v1030, %v984
        %v1063 = vadd.f32 %v1031, %v989
        %v1064 = vadd.f32 %v1032, %v994
        %v1065 = vadd.f32 %v1033, %v999
        %1066 = vst [vmem:[#allocation2] sm:$0xff] %v1034
        %1067 = vst [vmem:[#allocation2 + $0x8] sm:$0xff] %v1035
        %1068 = vst [vmem:[#allocation2 + $0x10] sm:$0xff] %v1036
        %1069 = vst [vmem:[#allocation2 + $0x18] sm:$0xff] %v1037
        %1070 = vst [vmem:[#allocation2 + $0x20] sm:$0xff] %v1038
        %1071 = vst [vmem:[#allocation2 + $0x28] sm:$0xff] %v1039
        %1072 = vst [vmem:[#allocation2 + $0x30] sm:$0xff] %v1040
        %1073 = vst [vmem:[#allocation2 + $0x38] sm:$0xff] %v1041
        %1074 = vst [vmem:[#allocation2 + $0x40] sm:$0xff] %v1042
        %1075 = vst [vmem:[#allocation2 + $0x48] sm:$0xff] %v1043
        %1076 = vst [vmem:[#allocation2 + $0x50] sm:$0xff] %v1044
        %1077 = vst [vmem:[#allocation2 + $0x58] sm:$0xff] %v1045
        %1078 = vst [vmem:[#allocation2 + $0x60] sm:$0xff] %v1046
        %1079 = vst [vmem:[#allocation2 + $0x68] sm:$0xff] %v1047
        %1080 = vst [vmem:[#allocation2 + $0x70] sm:$0xff] %v1048
        %1081 = vst [vmem:[#allocation2 + $0x78] sm:$0xff] %v1049
        %1082 = vst [vmem:[#allocation2 + $0x80] sm:$0xff] %v1050
        %1083 = vst [vmem:[#allocation2 + $0x88] sm:$0xff] %v1051
        %1084 = vst [vmem:[#allocation2 + $0x90] sm:$0xff] %v1052
        %1085 = vst [vmem:[#allocation2 + $0x98] sm:$0xff] %v1053
        %1086 = vst [vmem:[#allocation2 + $0xa0] sm:$0xff] %v1054
        %1087 = vst [vmem:[#allocation2 + $0xa8] sm:$0xff] %v1055
        %1088 = vst [vmem:[#allocation2 + $0xb0] sm:$0xff] %v1056
        %1089 = vst [vmem:[#allocation2 + $0xb8] sm:$0xff] %v1057
        %1090 = vst [vmem:[#allocation2 + $0xc0] sm:$0xff] %v1058
        %1091 = vst [vmem:[#allocation2 + $0xc8] sm:$0xff] %v1059
        %1092 = vst [vmem:[#allocation2 + $0xd0] sm:$0xff] %v1060
        %1093 = vst [vmem:[#allocation2 + $0xd8] sm:$0xff] %v1061
        %1094 = vst [vmem:[#allocation2 + $0xe0] sm:$0xff] %v1062
        %1095 = vst [vmem:[#allocation2 + $0xe8] sm:$0xff] %v1063
        %1096 = vst [vmem:[#allocation2 + $0xf0] sm:$0xff] %v1064
        %1097 = vst [vmem:[#allocation2 + $0xf8] sm:$0xff] %v1065
        %s1098 = scalar_lea.vmem %s233, 32
        %v1099 = vld [vmem:[%s1098] sm:$0xff]
        %v1100 = vld [vmem:[%s1098 + $0x8] sm:$0xff]
        %v1101 = vld [vmem:[%s1098 + $0x10] sm:$0xff]
        %v1102 = vld [vmem:[%s1098 + $0x18] sm:$0xff]
        %v1103 = vld [vmem:[%s1098 + $0x20] sm:$0xff]
        %v1104 = vld [vmem:[%s1098 + $0x28] sm:$0xff]
        %v1105 = vld [vmem:[%s1098 + $0x30] sm:$0xff]
        %v1106 = vld [vmem:[%s1098 + $0x38] sm:$0xff]
        %v1107 = vld [vmem:[%s1098 + $0x40] sm:$0xff]
        %v1108 = vld [vmem:[%s1098 + $0x48] sm:$0xff]
        %v1109 = vld [vmem:[%s1098 + $0x50] sm:$0xff]
        %v1110 = vld [vmem:[%s1098 + $0x58] sm:$0xff]
        %v1111 = vld [vmem:[%s1098 + $0x60] sm:$0xff]
        %v1112 = vld [vmem:[%s1098 + $0x68] sm:$0xff]
        %v1113 = vld [vmem:[%s1098 + $0x70] sm:$0xff]
        %v1114 = vld [vmem:[%s1098 + $0x78] sm:$0xff]
        %v1115 = vld [vmem:[%s1098 + $0x80] sm:$0xff]
        %v1116 = vld [vmem:[%s1098 + $0x88] sm:$0xff]
        %v1117 = vld [vmem:[%s1098 + $0x90] sm:$0xff]
        %v1118 = vld [vmem:[%s1098 + $0x98] sm:$0xff]
        %v1119 = vld [vmem:[%s1098 + $0xa0] sm:$0xff]
        %v1120 = vld [vmem:[%s1098 + $0xa8] sm:$0xff]
        %v1121 = vld [vmem:[%s1098 + $0xb0] sm:$0xff]
        %v1122 = vld [vmem:[%s1098 + $0xb8] sm:$0xff]
        %v1123 = vld [vmem:[%s1098 + $0xc0] sm:$0xff]
        %v1124 = vld [vmem:[%s1098 + $0xc8] sm:$0xff]
        %v1125 = vld [vmem:[%s1098 + $0xd0] sm:$0xff]
        %v1126 = vld [vmem:[%s1098 + $0xd8] sm:$0xff]
        %v1127 = vld [vmem:[%s1098 + $0xe0] sm:$0xff]
        %v1128 = vld [vmem:[%s1098 + $0xe8] sm:$0xff]
        %v1129 = vld [vmem:[%s1098 + $0xf0] sm:$0xff]
        %v1130 = vld [vmem:[%s1098 + $0xf8] sm:$0xff]
        %s1131 = scalar_lea.vmem %s238, 32
        %v1132 = vld [vmem:[%s1131] sm:$0xff]
        %v1133 = vld [vmem:[%s1131 + $0x8] sm:$0xf]
        %v1135 = vsel %vm284, %v1099, 0
        %v1138 = vsel %vm284, %v1100, 0
        %v1141 = vsel %vm284, %v1101, 0
        %v1144 = vsel %vm284, %v1102, 0
        %v1147 = vsel %vm284, %v1103, 0
        %v1150 = vsel %vm284, %v1104, 0
        %v1153 = vsel %vm284, %v1105, 0
        %v1156 = vsel %vm284, %v1106, 0
        %v1159 = vsel %vm284, %v1107, 0
        %v1162 = vsel %vm284, %v1108, 0
        %v1165 = vsel %vm284, %v1109, 0
        %v1168 = vsel %vm284, %v1110, 0
        %v1171 = vsel %vm284, %v1111, 0
        %v1174 = vsel %vm284, %v1112, 0
        %v1177 = vsel %vm284, %v1113, 0
        %v1180 = vsel %vm284, %v1114, 0
        %v1183 = vsel %vm284, %v1115, 0
        %v1186 = vsel %vm284, %v1116, 0
        %v1189 = vsel %vm284, %v1117, 0
        %v1192 = vsel %vm284, %v1118, 0
        %v1195 = vsel %vm284, %v1119, 0
        %v1198 = vsel %vm284, %v1120, 0
        %v1201 = vsel %vm284, %v1121, 0
        %v1204 = vsel %vm284, %v1122, 0
        %v1207 = vsel %vm284, %v1123, 0
        %v1210 = vsel %vm284, %v1124, 0
        %v1213 = vsel %vm284, %v1125, 0
        %v1216 = vsel %vm284, %v1126, 0
        %v1219 = vsel %vm284, %v1127, 0
        %v1222 = vsel %vm284, %v1128, 0
        %v1225 = vsel %vm284, %v1129, 0
        %v1228 = vsel %vm284, %v1130, 0
        %v1231 = vsel %vm381, %v1133, 0
        %1233 = vmatprep.subr.mxu0 0.0
        %1234 = vmatpush1.msra.mxu0 0.0
        %1235 = vmatprep.subr.mxu0 0.0
        %1236 = vmatpush1.msra.mxu0 0.0
        %1237 = vmatprep.subr.mxu0 0.0
        %1238 = vmatpush1.msra.mxu0 0.0
        %1239 = vmatprep.subr.mxu0 0.0
        %1240 = vmatpush1.msra.mxu0 0.0
        %1241 = vmatprep.subr.mxu0 0.0
        %1242 = vmatpush1.msra.mxu0 0.0
        %1243 = vmatprep.subr.mxu0 0.0
        %1244 = vmatpush1.msra.mxu0 0.0
        %1245 = vmatprep.subr.mxu0 0.0
        %1246 = vmatpush1.msra.mxu0 0.0
        %1247 = vmatprep.subr.mxu0 0.0
        %1248 = vmatpush1.msra.mxu0 0.0
        %1249 = vmatprep.subr.mxu0 0.0
        %1250 = vmatpush1.msra.mxu0 0.0
        %1251 = vmatprep.subr.mxu0 0.0
        %1252 = vmatpush1.msra.mxu0 0.0
        %1253 = vmatprep.subr.mxu0 0.0
        %1254 = vmatpush1.msra.mxu0 0.0
        %1255 = vmatprep.subr.mxu0 0.0
        %1256 = vmatpush1.msra.mxu0 0.0
        %1257 = vmatprep.subr.mxu0 0.0
        %1258 = vmatpush1.msra.mxu0 0.0
        %1259 = vmatprep.subr.mxu0 0.0
        %1260 = vmatpush1.msra.mxu0 0.0
        %1261 = vmatprep.subr.mxu0 0.0
        %1262 = vmatpush1.msra.mxu0 %v1231
        %1263 = vmatprep.subr.mxu0 0.0
        %1264 = vmatpush1.msra.mxu0 %v1132
        %1265 = vmatprep.subr.mxu0 0.0
        %1266 = vmatpush2.msra.mxu0 0.0
        %1267 = vmatprep.subr.mxu0 0.0
        %1268 = vmatpush2.msra.mxu0 0.0
        %1269 = vmatprep.subr.mxu0 0.0
        %1270 = vmatpush2.msra.mxu0 0.0
        %1271 = vmatprep.subr.mxu0 0.0
        %1272 = vmatpush2.msra.mxu0 0.0
        %1273 = vmatprep.subr.mxu0 0.0
        %1274 = vmatpush2.msra.mxu0 0.0
        %1275 = vmatprep.subr.mxu0 0.0
        %1276 = vmatpush2.msra.mxu0 0.0
        %1277 = vmatprep.subr.mxu0 0.0
        %1278 = vmatpush2.msra.mxu0 0.0
        %1279 = vmatprep.subr.mxu0 0.0
        %1280 = vmatpush2.msra.mxu0 0.0
        %1281 = vmatprep.subr.mxu0 0.0
        %1282 = vmatpush2.msra.mxu0 0.0
        %1283 = vmatprep.subr.mxu0 0.0
        %1284 = vmatpush2.msra.mxu0 0.0
        %1285 = vmatprep.subr.mxu0 0.0
        %1286 = vmatpush2.msra.mxu0 0.0
        %1287 = vmatprep.subr.mxu0 0.0
        %1288 = vmatpush2.msra.mxu0 0.0
        %1289 = vmatprep.subr.mxu0 0.0
        %1290 = vmatpush2.msra.mxu0 0.0
        %1291 = vmatprep.subr.mxu0 0.0
        %1292 = vmatpush2.msra.mxu0 0.0
        %1293 = vmatprep.subr.mxu0 0.0
        %1294 = vmatpush2.msra.mxu0 0.0
        %1295 = vmatprep.subr.mxu0 0.0
        %1296 = vmatpush2.msra.mxu0 0.0
        %1297 = vmatprep.mubr.f32.mxu0 0.0
        %1298 = vmatmul.mubr.f32.gmra.mxu0 %v1135
        %v1299 = vpop.f32.mrf.mxu0
        %v1300 = vadd.f32 0.0, %v1299
        %v1301 = vpop.f32.mrf.mxu0
        %1302 = vmatprep.mubr.f32.mxu0 0.0
        %1303 = vmatmul.mubr.f32.gmra.mxu0 %v1138
        %v1304 = vpop.f32.mrf.mxu0
        %v1305 = vadd.f32 0.0, %v1304
        %v1306 = vpop.f32.mrf.mxu0
        %1307 = vmatprep.mubr.f32.mxu0 0.0
        %1308 = vmatmul.mubr.f32.gmra.mxu0 %v1141
        %v1309 = vpop.f32.mrf.mxu0
        %v1310 = vadd.f32 0.0, %v1309
        %v1311 = vpop.f32.mrf.mxu0
        %1312 = vmatprep.mubr.f32.mxu0 0.0
        %1313 = vmatmul.mubr.f32.gmra.mxu0 %v1144
        %v1314 = vpop.f32.mrf.mxu0
        %v1315 = vadd.f32 0.0, %v1314
        %v1316 = vpop.f32.mrf.mxu0
        %1317 = vmatprep.mubr.f32.mxu0 0.0
        %1318 = vmatmul.mubr.f32.gmra.mxu0 %v1147
        %v1319 = vpop.f32.mrf.mxu0
        %v1320 = vadd.f32 0.0, %v1319
        %v1321 = vpop.f32.mrf.mxu0
        %1322 = vmatprep.mubr.f32.mxu0 0.0
        %1323 = vmatmul.mubr.f32.gmra.mxu0 %v1150
        %v1324 = vpop.f32.mrf.mxu0
        %v1325 = vadd.f32 0.0, %v1324
        %v1326 = vpop.f32.mrf.mxu0
        %1327 = vmatprep.mubr.f32.mxu0 0.0
        %1328 = vmatmul.mubr.f32.gmra.mxu0 %v1153
        %v1329 = vpop.f32.mrf.mxu0
        %v1330 = vadd.f32 0.0, %v1329
        %v1331 = vpop.f32.mrf.mxu0
        %1332 = vmatprep.mubr.f32.mxu0 0.0
        %1333 = vmatmul.mubr.f32.gmra.mxu0 %v1156
        %v1334 = vpop.f32.mrf.mxu0
        %v1335 = vadd.f32 0.0, %v1334
        %v1336 = vpop.f32.mrf.mxu0
        %1337 = vmatprep.mubr.f32.mxu0 0.0
        %1338 = vmatmul.mubr.f32.gmra.mxu0 %v1159
        %v1339 = vpop.f32.mrf.mxu0
        %v1340 = vadd.f32 0.0, %v1339
        %v1341 = vpop.f32.mrf.mxu0
        %1342 = vmatprep.mubr.f32.mxu0 0.0
        %1343 = vmatmul.mubr.f32.gmra.mxu0 %v1162
        %v1344 = vpop.f32.mrf.mxu0
        %v1345 = vadd.f32 0.0, %v1344
        %v1346 = vpop.f32.mrf.mxu0
        %1347 = vmatprep.mubr.f32.mxu0 0.0
        %1348 = vmatmul.mubr.f32.gmra.mxu0 %v1165
        %v1349 = vpop.f32.mrf.mxu0
        %v1350 = vadd.f32 0.0, %v1349
        %v1351 = vpop.f32.mrf.mxu0
        %1352 = vmatprep.mubr.f32.mxu0 0.0
        %1353 = vmatmul.mubr.f32.gmra.mxu0 %v1168
        %v1354 = vpop.f32.mrf.mxu0
        %v1355 = vadd.f32 0.0, %v1354
        %v1356 = vpop.f32.mrf.mxu0
        %1357 = vmatprep.mubr.f32.mxu0 0.0
        %1358 = vmatmul.mubr.f32.gmra.mxu0 %v1171
        %v1359 = vpop.f32.mrf.mxu0
        %v1360 = vadd.f32 0.0, %v1359
        %v1361 = vpop.f32.mrf.mxu0
        %1362 = vmatprep.mubr.f32.mxu0 0.0
        %1363 = vmatmul.mubr.f32.gmra.mxu0 %v1174
        %v1364 = vpop.f32.mrf.mxu0
        %v1365 = vadd.f32 0.0, %v1364
        %v1366 = vpop.f32.mrf.mxu0
        %1367 = vmatprep.mubr.f32.mxu0 0.0
        %1368 = vmatmul.mubr.f32.gmra.mxu0 %v1177
        %v1369 = vpop.f32.mrf.mxu0
        %v1370 = vadd.f32 0.0, %v1369
        %v1371 = vpop.f32.mrf.mxu0
        %1372 = vmatprep.mubr.f32.mxu0 0.0
        %1373 = vmatmul.mubr.f32.gmra.mxu0 %v1180
        %v1374 = vpop.f32.mrf.mxu0
        %v1375 = vadd.f32 0.0, %v1374
        %v1376 = vpop.f32.mrf.mxu0
        %1377 = vmatprep.mubr.f32.mxu0 0.0
        %1378 = vmatmul.mubr.f32.gmra.mxu0 %v1183
        %v1379 = vpop.f32.mrf.mxu0
        %v1380 = vadd.f32 0.0, %v1379
        %v1381 = vpop.f32.mrf.mxu0
        %1382 = vmatprep.mubr.f32.mxu0 0.0
        %1383 = vmatmul.mubr.f32.gmra.mxu0 %v1186
        %v1384 = vpop.f32.mrf.mxu0
        %v1385 = vadd.f32 0.0, %v1384
        %v1386 = vpop.f32.mrf.mxu0
        %1387 = vmatprep.mubr.f32.mxu0 0.0
        %1388 = vmatmul.mubr.f32.gmra.mxu0 %v1189
        %v1389 = vpop.f32.mrf.mxu0
        %v1390 = vadd.f32 0.0, %v1389
        %v1391 = vpop.f32.mrf.mxu0
        %1392 = vmatprep.mubr.f32.mxu0 0.0
        %1393 = vmatmul.mubr.f32.gmra.mxu0 %v1192
        %v1394 = vpop.f32.mrf.mxu0
        %v1395 = vadd.f32 0.0, %v1394
        %v1396 = vpop.f32.mrf.mxu0
        %1397 = vmatprep.mubr.f32.mxu0 0.0
        %1398 = vmatmul.mubr.f32.gmra.mxu0 %v1195
        %v1399 = vpop.f32.mrf.mxu0
        %v1400 = vadd.f32 0.0, %v1399
        %v1401 = vpop.f32.mrf.mxu0
        %1402 = vmatprep.mubr.f32.mxu0 0.0
        %1403 = vmatmul.mubr.f32.gmra.mxu0 %v1198
        %v1404 = vpop.f32.mrf.mxu0
        %v1405 = vadd.f32 0.0, %v1404
        %v1406 = vpop.f32.mrf.mxu0
        %1407 = vmatprep.mubr.f32.mxu0 0.0
        %1408 = vmatmul.mubr.f32.gmra.mxu0 %v1201
        %v1409 = vpop.f32.mrf.mxu0
        %v1410 = vadd.f32 0.0, %v1409
        %v1411 = vpop.f32.mrf.mxu0
        %1412 = vmatprep.mubr.f32.mxu0 0.0
        %1413 = vmatmul.mubr.f32.gmra.mxu0 %v1204
        %v1414 = vpop.f32.mrf.mxu0
        %v1415 = vadd.f32 0.0, %v1414
        %v1416 = vpop.f32.mrf.mxu0
        %1417 = vmatprep.mubr.f32.mxu0 0.0
        %1418 = vmatmul.mubr.f32.gmra.mxu0 %v1207
        %v1419 = vpop.f32.mrf.mxu0
        %v1420 = vadd.f32 0.0, %v1419
        %v1421 = vpop.f32.mrf.mxu0
        %1422 = vmatprep.mubr.f32.mxu0 0.0
        %1423 = vmatmul.mubr.f32.gmra.mxu0 %v1210
        %v1424 = vpop.f32.mrf.mxu0
        %v1425 = vadd.f32 0.0, %v1424
        %v1426 = vpop.f32.mrf.mxu0
        %1427 = vmatprep.mubr.f32.mxu0 0.0
        %1428 = vmatmul.mubr.f32.gmra.mxu0 %v1213
        %v1429 = vpop.f32.mrf.mxu0
        %v1430 = vadd.f32 0.0, %v1429
        %v1431 = vpop.f32.mrf.mxu0
        %1432 = vmatprep.mubr.f32.mxu0 0.0
        %1433 = vmatmul.mubr.f32.gmra.mxu0 %v1216
        %v1434 = vpop.f32.mrf.mxu0
        %v1435 = vadd.f32 0.0, %v1434
        %v1436 = vpop.f32.mrf.mxu0
        %1437 = vmatprep.mubr.f32.mxu0 0.0
        %1438 = vmatmul.mubr.f32.gmra.mxu0 %v1219
        %v1439 = vpop.f32.mrf.mxu0
        %v1440 = vadd.f32 0.0, %v1439
        %v1441 = vpop.f32.mrf.mxu0
        %1442 = vmatprep.mubr.f32.mxu0 0.0
        %1443 = vmatmul.mubr.f32.gmra.mxu0 %v1222
        %v1444 = vpop.f32.mrf.mxu0
        %v1445 = vadd.f32 0.0, %v1444
        %v1446 = vpop.f32.mrf.mxu0
        %1447 = vmatprep.mubr.f32.mxu0 0.0
        %1448 = vmatmul.mubr.f32.gmra.mxu0 %v1225
        %v1449 = vpop.f32.mrf.mxu0
        %v1450 = vadd.f32 0.0, %v1449
        %v1451 = vpop.f32.mrf.mxu0
        %1452 = vmatprep.mubr.f32.mxu0 0.0
        %1453 = vmatmul.mubr.f32.gmra.mxu0 %v1228
        %v1454 = vpop.f32.mrf.mxu0
        %v1455 = vadd.f32 0.0, %v1454
        %v1456 = vpop.f32.mrf.mxu0
        %1457 = vdwg.mxu0
        %v1458 = vld [vmem:[#allocation2] sm:$0xff]
        %v1459 = vld [vmem:[#allocation2 + $0x8] sm:$0xff]
        %v1460 = vld [vmem:[#allocation2 + $0x10] sm:$0xff]
        %v1461 = vld [vmem:[#allocation2 + $0x18] sm:$0xff]
        %v1462 = vld [vmem:[#allocation2 + $0x20] sm:$0xff]
        %v1463 = vld [vmem:[#allocation2 + $0x28] sm:$0xff]
        %v1464 = vld [vmem:[#allocation2 + $0x30] sm:$0xff]
        %v1465 = vld [vmem:[#allocation2 + $0x38] sm:$0xff]
        %v1466 = vld [vmem:[#allocation2 + $0x40] sm:$0xff]
        %v1467 = vld [vmem:[#allocation2 + $0x48] sm:$0xff]
        %v1468 = vld [vmem:[#allocation2 + $0x50] sm:$0xff]
        %v1469 = vld [vmem:[#allocation2 + $0x58] sm:$0xff]
        %v1470 = vld [vmem:[#allocation2 + $0x60] sm:$0xff]
        %v1471 = vld [vmem:[#allocation2 + $0x68] sm:$0xff]
        %v1472 = vld [vmem:[#allocation2 + $0x70] sm:$0xff]
        %v1473 = vld [vmem:[#allocation2 + $0x78] sm:$0xff]
        %v1474 = vld [vmem:[#allocation2 + $0x80] sm:$0xff]
        %v1475 = vld [vmem:[#allocation2 + $0x88] sm:$0xff]
        %v1476 = vld [vmem:[#allocation2 + $0x90] sm:$0xff]
        %v1477 = vld [vmem:[#allocation2 + $0x98] sm:$0xff]
        %v1478 = vld [vmem:[#allocation2 + $0xa0] sm:$0xff]
        %v1479 = vld [vmem:[#allocation2 + $0xa8] sm:$0xff]
        %v1480 = vld [vmem:[#allocation2 + $0xb0] sm:$0xff]
        %v1481 = vld [vmem:[#allocation2 + $0xb8] sm:$0xff]
        %v1482 = vld [vmem:[#allocation2 + $0xc0] sm:$0xff]
        %v1483 = vld [vmem:[#allocation2 + $0xc8] sm:$0xff]
        %v1484 = vld [vmem:[#allocation2 + $0xd0] sm:$0xff]
        %v1485 = vld [vmem:[#allocation2 + $0xd8] sm:$0xff]
        %v1486 = vld [vmem:[#allocation2 + $0xe0] sm:$0xff]
        %v1487 = vld [vmem:[#allocation2 + $0xe8] sm:$0xff]
        %v1488 = vld [vmem:[#allocation2 + $0xf0] sm:$0xff]
        %v1489 = vld [vmem:[#allocation2 + $0xf8] sm:$0xff]
        %v1490 = vadd.f32 %v1458, %v1300
        %v1491 = vadd.f32 %v1459, %v1305
        %v1492 = vadd.f32 %v1460, %v1310
        %v1493 = vadd.f32 %v1461, %v1315
        %v1494 = vadd.f32 %v1462, %v1320
        %v1495 = vadd.f32 %v1463, %v1325
        %v1496 = vadd.f32 %v1464, %v1330
        %v1497 = vadd.f32 %v1465, %v1335
        %v1498 = vadd.f32 %v1466, %v1340
        %v1499 = vadd.f32 %v1467, %v1345
        %v1500 = vadd.f32 %v1468, %v1350
        %v1501 = vadd.f32 %v1469, %v1355
        %v1502 = vadd.f32 %v1470, %v1360
        %v1503 = vadd.f32 %v1471, %v1365
        %v1504 = vadd.f32 %v1472, %v1370
        %v1505 = vadd.f32 %v1473, %v1375
        %v1506 = vadd.f32 %v1474, %v1380
        %v1507 = vadd.f32 %v1475, %v1385
        %v1508 = vadd.f32 %v1476, %v1390
        %v1509 = vadd.f32 %v1477, %v1395
        %v1510 = vadd.f32 %v1478, %v1400
        %v1511 = vadd.f32 %v1479, %v1405
        %v1512 = vadd.f32 %v1480, %v1410
        %v1513 = vadd.f32 %v1481, %v1415
        %v1514 = vadd.f32 %v1482, %v1420
        %v1515 = vadd.f32 %v1483, %v1425
        %v1516 = vadd.f32 %v1484, %v1430
        %v1517 = vadd.f32 %v1485, %v1435
        %v1518 = vadd.f32 %v1486, %v1440
        %v1519 = vadd.f32 %v1487, %v1445
        %v1520 = vadd.f32 %v1488, %v1450
        %v1521 = vadd.f32 %v1489, %v1455
        %1522 = vst [vmem:[#allocation2] sm:$0xff] %v1490
        %1523 = vst [vmem:[#allocation2 + $0x8] sm:$0xff] %v1491
        %1524 = vst [vmem:[#allocation2 + $0x10] sm:$0xff] %v1492
        %1525 = vst [vmem:[#allocation2 + $0x18] sm:$0xff] %v1493
        %1526 = vst [vmem:[#allocation2 + $0x20] sm:$0xff] %v1494
        %1527 = vst [vmem:[#allocation2 + $0x28] sm:$0xff] %v1495
        %1528 = vst [vmem:[#allocation2 + $0x30] sm:$0xff] %v1496
        %1529 = vst [vmem:[#allocation2 + $0x38] sm:$0xff] %v1497
        %1530 = vst [vmem:[#allocation2 + $0x40] sm:$0xff] %v1498
        %1531 = vst [vmem:[#allocation2 + $0x48] sm:$0xff] %v1499
        %1532 = vst [vmem:[#allocation2 + $0x50] sm:$0xff] %v1500
        %1533 = vst [vmem:[#allocation2 + $0x58] sm:$0xff] %v1501
        %1534 = vst [vmem:[#allocation2 + $0x60] sm:$0xff] %v1502
        %1535 = vst [vmem:[#allocation2 + $0x68] sm:$0xff] %v1503
        %1536 = vst [vmem:[#allocation2 + $0x70] sm:$0xff] %v1504
        %1537 = vst [vmem:[#allocation2 + $0x78] sm:$0xff] %v1505
        %1538 = vst [vmem:[#allocation2 + $0x80] sm:$0xff] %v1506
        %1539 = vst [vmem:[#allocation2 + $0x88] sm:$0xff] %v1507
        %1540 = vst [vmem:[#allocation2 + $0x90] sm:$0xff] %v1508
        %1541 = vst [vmem:[#allocation2 + $0x98] sm:$0xff] %v1509
        %1542 = vst [vmem:[#allocation2 + $0xa0] sm:$0xff] %v1510
        %1543 = vst [vmem:[#allocation2 + $0xa8] sm:$0xff] %v1511
        %1544 = vst [vmem:[#allocation2 + $0xb0] sm:$0xff] %v1512
        %1545 = vst [vmem:[#allocation2 + $0xb8] sm:$0xff] %v1513
        %1546 = vst [vmem:[#allocation2 + $0xc0] sm:$0xff] %v1514
        %1547 = vst [vmem:[#allocation2 + $0xc8] sm:$0xff] %v1515
        %1548 = vst [vmem:[#allocation2 + $0xd0] sm:$0xff] %v1516
        %1549 = vst [vmem:[#allocation2 + $0xd8] sm:$0xff] %v1517
        %1550 = vst [vmem:[#allocation2 + $0xe0] sm:$0xff] %v1518
        %1551 = vst [vmem:[#allocation2 + $0xe8] sm:$0xff] %v1519
        %1552 = vst [vmem:[#allocation2 + $0xf0] sm:$0xff] %v1520
        %1553 = vst [vmem:[#allocation2 + $0xf8] sm:$0xff] %v1521
        %v1554 = vld [vmem:[#allocation2] sm:$0xff]
        %v1555 = vld [vmem:[#allocation2 + $0x8] sm:$0xff]
        %v1556 = vld [vmem:[#allocation2 + $0x10] sm:$0xff]
        %v1557 = vld [vmem:[#allocation2 + $0x18] sm:$0xff]
        %v1558 = vld [vmem:[#allocation2 + $0x20] sm:$0xff]
        %v1559 = vld [vmem:[#allocation2 + $0x28] sm:$0xff]
        %v1560 = vld [vmem:[#allocation2 + $0x30] sm:$0xff]
        %v1561 = vld [vmem:[#allocation2 + $0x38] sm:$0xff]
        %v1562 = vld [vmem:[#allocation2 + $0x40] sm:$0xff]
        %v1563 = vld [vmem:[#allocation2 + $0x48] sm:$0xff]
        %v1564 = vld [vmem:[#allocation2 + $0x50] sm:$0xff]
        %v1565 = vld [vmem:[#allocation2 + $0x58] sm:$0xff]
        %v1566 = vld [vmem:[#allocation2 + $0x60] sm:$0xff]
        %v1567 = vld [vmem:[#allocation2 + $0x68] sm:$0xff]
        %v1568 = vld [vmem:[#allocation2 + $0x70] sm:$0xff]
        %v1569 = vld [vmem:[#allocation2 + $0x78] sm:$0xff]
        %v1570 = vld [vmem:[#allocation2 + $0x80] sm:$0xff]
        %v1571 = vld [vmem:[#allocation2 + $0x88] sm:$0xff]
        %v1572 = vld [vmem:[#allocation2 + $0x90] sm:$0xff]
        %v1573 = vld [vmem:[#allocation2 + $0x98] sm:$0xff]
        %v1574 = vld [vmem:[#allocation2 + $0xa0] sm:$0xff]
        %v1575 = vld [vmem:[#allocation2 + $0xa8] sm:$0xff]
        %v1576 = vld [vmem:[#allocation2 + $0xb0] sm:$0xff]
        %v1577 = vld [vmem:[#allocation2 + $0xb8] sm:$0xff]
        %v1578 = vld [vmem:[#allocation2 + $0xc0] sm:$0xff]
        %v1579 = vld [vmem:[#allocation2 + $0xc8] sm:$0xff]
        %v1580 = vld [vmem:[#allocation2 + $0xd0] sm:$0xff]
        %v1581 = vld [vmem:[#allocation2 + $0xd8] sm:$0xff]
        %v1582 = vld [vmem:[#allocation2 + $0xe0] sm:$0xff]
        %v1583 = vld [vmem:[#allocation2 + $0xe8] sm:$0xff]
        %v1584 = vld [vmem:[#allocation2 + $0xf0] sm:$0xff]
        %v1585 = vld [vmem:[#allocation2 + $0xf8] sm:$0xff]
        %1586 = vst [vmem:[%s223] sm:$0xff] %v1554
        %1587 = vst [vmem:[%s223 + $0x8] sm:$0xff] %v1555
        %1588 = vst [vmem:[%s223 + $0x10] sm:$0xff] %v1556
        %1589 = vst [vmem:[%s223 + $0x18] sm:$0xff] %v1557
        %1590 = vst [vmem:[%s223 + $0x20] sm:$0xff] %v1558
        %1591 = vst [vmem:[%s223 + $0x28] sm:$0xff] %v1559
        %1592 = vst [vmem:[%s223 + $0x30] sm:$0xff] %v1560
        %1593 = vst [vmem:[%s223 + $0x38] sm:$0xff] %v1561
        %1594 = vst [vmem:[%s223 + $0x40] sm:$0xff] %v1562
        %1595 = vst [vmem:[%s223 + $0x48] sm:$0xff] %v1563
        %1596 = vst [vmem:[%s223 + $0x50] sm:$0xff] %v1564
        %1597 = vst [vmem:[%s223 + $0x58] sm:$0xff] %v1565
        %1598 = vst [vmem:[%s223 + $0x60] sm:$0xff] %v1566
        %1599 = vst [vmem:[%s223 + $0x68] sm:$0xff] %v1567
        %1600 = vst [vmem:[%s223 + $0x70] sm:$0xff] %v1568
        %1601 = vst [vmem:[%s223 + $0x78] sm:$0xff] %v1569
        %1602 = vst [vmem:[%s223 + $0x80] sm:$0xff] %v1570
        %1603 = vst [vmem:[%s223 + $0x88] sm:$0xff] %v1571
        %1604 = vst [vmem:[%s223 + $0x90] sm:$0xff] %v1572
        %1605 = vst [vmem:[%s223 + $0x98] sm:$0xff] %v1573
        %1606 = vst [vmem:[%s223 + $0xa0] sm:$0xff] %v1574
        %1607 = vst [vmem:[%s223 + $0xa8] sm:$0xff] %v1575
        %1608 = vst [vmem:[%s223 + $0xb0] sm:$0xff] %v1576
        %1609 = vst [vmem:[%s223 + $0xb8] sm:$0xff] %v1577
        %1610 = vst [vmem:[%s223 + $0xc0] sm:$0xff] %v1578
        %1611 = vst [vmem:[%s223 + $0xc8] sm:$0xff] %v1579
        %1612 = vst [vmem:[%s223 + $0xd0] sm:$0xff] %v1580
        %1613 = vst [vmem:[%s223 + $0xd8] sm:$0xff] %v1581
        %1614 = vst [vmem:[%s223 + $0xe0] sm:$0xff] %v1582
        %1615 = vst [vmem:[%s223 + $0xe8] sm:$0xff] %v1583
        %1616 = vst [vmem:[%s223 + $0xf0] sm:$0xff] %v1584
        %1617 = vst [vmem:[%s223 + $0xf8] sm:$0xff] %v1585
        %s1618 = sand.u32 %s128, 1
        %s1619 = scalar_lea.sflag [#allocation4], %s1618
        %s1620 = sand.u32 %s128, 1
        %s1621 = smul.addr %s1620, 256
        %s1622 = scalar_lea.vmem [#allocation3], %s1621
        // Predicated region
        $region33: #{tpu_custom_call.1} parent=31 // pred_check
          %p1623 = pneg %p138
        $region34: #{tpu_custom_call.1} parent=31 // pred_check_branch
          %1625 = sbr.rel (%p1623) target = $region36
        $region35: #{tpu_custom_call.1} parent=31 // pred_region
          %s1626 = smul.u32 32, %s23
          %s1628 = ssub.s32 4096, 4096
          %1629 = vsyncadd %s1619, %s1628
          %s1630 = sadd.s32 %s24, %s1626
          %s1631 = smul.addr %s22, 32
          %s1632 = sadd.s32 %s1630, %s1631
          %s1633 = smul.addr %s1632, 128
          %s1634 = scalar_lea.hbm %s3, %s1633
          %s1635 = sshll.u32 %s1622, 4
          %s1636 = int_to_ptr.vmem [resolvable:$true] %s1635
          %1641 = dma.vmem_to_hbm [thread:$0]  %s1636, 4096, %s1634, %s1619, 128, 128, 8
        $region36: #{tpu_custom_call.1} parent=31 // pred_fallthru
          _
      $region32: #{tpu_custom_call.1} parent=5 // pred_fallthru
        _
      %p1642 = scmp.le.s32.totalorder 2, %s12
      // Predicated region
      $region37: #{tpu_custom_call.1} parent=5 // pred_check
        %p1643 = pneg %p1642
      $region38: #{tpu_custom_call.1} parent=5 // pred_check_branch
        %1645 = sbr.rel (%p1643) target = $region40
      $region39: #{tpu_custom_call.1} parent=5 // pred_region
        %s1646 = ssub.s32 %s12, 2
        // Predicated region
        $region41: #{tpu_custom_call.1} parent=39 // pred_check
          %p1647 = pneg %p144
        $region42: #{tpu_custom_call.1} parent=39 // pred_check_branch
          %1649 = sbr.rel (%p1647) target = $region44
        $region43: #{tpu_custom_call.1} parent=39 // pred_region
          %s1650 = sand.u32 %s129, 1
          %s1651 = scalar_lea.sflag [#allocation4], %s1650
          %s1652 = sand.u32 %s129, 1
          %s1653 = smul.addr %s1652, 256
          %s1654 = scalar_lea.vmem [#allocation3], %s1653
          %1655 = dma.done %s1651, 4096
        $region44: #{tpu_custom_call.1} parent=39 // pred_fallthru
          _
      $region40: #{tpu_custom_call.1} parent=5 // pred_fallthru
        _
    $region6: #{tpu_custom_call.1} parent=1 // loop_footer
      %s16 = sadd.s32 1, %s12
    $region7: #{tpu_custom_call.1} parent=1 // loop_footer_branch
      %11 = sbr.rel target = $region3
    $region8: #{tpu_custom_call.1} parent=1 // loop_exit
      _
    %1656 = vsyncpa [#allocation4], 1
    %s1657 = scalar_lea.sflag [#allocation4], 1
    %1658 = vsyncpa %s1657, 1

</llo_original>
